<compile_context>
chip_gen: v6e
topology: v6e:2x2x1
jax: 0.10.0
libtpu: 0.0.40
codegen_flags: <defaults>
</compile_context>

<pallas_src>
import jax
import jax.numpy as jnp
from jax.experimental import pallas as pl
from jax.experimental.pallas import tpu as pltpu


def fused_multitask_head_kernel(x_ref, w0_ref, b0_ref, w1t_ref, b1t_ref,
                                o_ref, xp_ref):
    """One batch element per grid step, all heads fused.

    x_ref   : (1, H, W, Cin)   input tile (NHWC, channels on lanes)
    w0_ref  : (9*Cin, M)       im2col-reshaped, head-stacked 3x3 weight
    b0_ref  : (1, M)           stacked 3x3 bias            (M = m * n_heads)
    w1t_ref : (OC, M)          block-diagonal 1x1 weight, transposed
    b1t_ref : (OC, 1)          concatenated 1x1 bias (column)
    o_ref   : (1, OC, H*W)     lane-dense output tile (H*W multiple of 128)
    xp_ref  : (H+2, W+2, Cin)  VMEM scratch for the zero-padded input
    """
    H = x_ref.shape[1]
    W = x_ref.shape[2]
    Cin = x_ref.shape[3]

    # In-kernel halo: zero the scratch (every step: the grid axis is parallel,
    # so no cross-iteration init is assumed), then drop the tile into its
    # interior. Avoids a jnp.pad HBM round-trip before the kernel.
    xp_ref[...] = jnp.zeros_like(xp_ref)
    xp_ref[1:H + 1, 1:W + 1, :] = x_ref[0]

    # im2col: 9 shifted taps concatenated along the channel (lane) axis.
    cols = []
    for dy in range(3):
        for dx in range(3):
            cols.append(xp_ref[dy:dy + H, dx:dx + W, :].reshape(H * W, Cin))
    patches = jnp.concatenate(cols, axis=-1)                    # (H*W, 9*Cin)

    # 3x3 conv for all heads: one MXU matmul, K = 9*Cin.
    hidden = jnp.dot(patches, w0_ref[...],
                     preferred_element_type=jnp.float32)        # (H*W, M)
    hidden = jnp.maximum(hidden + b0_ref[...], 0.0)             # bias + ReLU

    # Fused 1x1 convs, emitted transposed (OC, H*W) for lane-dense stores:
    # out_t[o, n] = sum_m w1t[o, m] * hidden[n, m]   (block-diag keeps heads
    # independent).  Contraction on both trailing dims -> MXU (A @ B^T).
    out_t = jax.lax.dot_general(
        w1t_ref[...], hidden,
        dimension_numbers=(((1,), (1,)), ((), ())),
        preferred_element_type=jnp.float32) + b1t_ref[...]      # (OC, H*W)

    o_ref[0] = out_t.astype(o_ref.dtype)


def _fuse_params(params, Cin, dtype):
    """Stack per-head weights into fused kernel operands."""
    m = params[0][0].shape[3]
    n_heads = len(params)
    M = m * n_heads
    ocs = [p[2].shape[1] for p in params]
    OC = sum(ocs)

    # 3x3 weights stacked on output channels, then im2col-reshaped.
    w0 = jnp.concatenate([p[0] for p in params], axis=3)        # (3,3,Cin,M)
    w0 = w0.reshape(9 * Cin, M).astype(dtype)                   # K order = (dy,dx,cin)
    b0 = jnp.concatenate([p[1] for p in params], axis=1).astype(dtype)  # (1,M)

    # Block-diagonal 1x1 weight, stored transposed (OC, M).
    w1t = jnp.zeros((OC, M), dtype)
    off = 0
    for h, p in enumerate(params):
        oc = p[2].shape[1]
        w1t = w1t.at[off:off + oc, h * m:(h + 1) * m].set(p[2].T.astype(dtype))
        off += oc
    b1t = jnp.concatenate([p[3].reshape(-1, 1) for p in params],
                          axis=0).astype(dtype)                 # (OC,1)
    return w0, b0, w1t, b1t, M, OC


def multitask_head_forward(x_nchw, params):
    """params: list of (w0 (3,3,Cin,m), b0 (1,m), w1 (m,oc), b1 (1,oc))."""
    x = jnp.transpose(x_nchw, (0, 2, 3, 1))     # NCHW -> NHWC (channels on lanes)
    N, H, W, Cin = x.shape
    dtype = x.dtype
    w0, b0, w1t, b1t, M, OC = _fuse_params(params, Cin, dtype)

    y = pl.pallas_call(
        fused_multitask_head_kernel,
        out_shape=jax.ShapeDtypeStruct((N, OC, H * W), dtype),
        grid=(N,),
        in_specs=[
            pl.BlockSpec((1, H, W, Cin), lambda n: (n, 0, 0, 0)),
            pl.BlockSpec((9 * Cin, M), lambda n: (0, 0)),
            pl.BlockSpec((1, M), lambda n: (0, 0)),
            pl.BlockSpec((OC, M), lambda n: (0, 0)),
            pl.BlockSpec((OC, 1), lambda n: (0, 0)),
        ],
        out_specs=pl.BlockSpec((1, OC, H * W), lambda n: (n, 0, 0)),
        scratch_shapes=[pltpu.VMEM((H + 2, W + 2, Cin), dtype)],
        compiler_params=pltpu.CompilerParams(
            dimension_semantics=("parallel",)),
    )(x, w0, b0, w1t, b1t)

    # Output is already channel-major: pure reshape to NCHW, no transpose.
    return y.reshape(N, OC, H, W)


def make_params(key, input_channels, head_size, dtype=jnp.float32):
    m = input_channels // 4
    params = []
    for oc in sum(head_size, []):
        key, k0, k1, k2, k3 = jax.random.split(key, 5)
        w0 = jax.random.normal(k0, (3, 3, input_channels, m), dtype) * 0.1
        b0 = jax.random.normal(k1, (1, m), dtype) * 0.1
        w1 = jax.random.normal(k2, (m, oc), dtype) * 0.1
        b1 = jax.random.normal(k3, (1, oc), dtype) * 0.1
        params.append((w0, b0, w1, b1))
    return params


def reference_forward(x_nchw, params):
    """Pure-JAX reference (per-head conv), same math as the PyTorch module."""
    x = jnp.transpose(x_nchw, (0, 2, 3, 1))
    dn = jax.lax.conv_dimension_numbers(x.shape, (3, 3, 1, 1),
                                        ("NHWC", "HWIO", "NHWC"))
    outs = []
    for (w0, b0, w1, b1) in params:
        h = jax.lax.conv_general_dilated(x, w0, (1, 1), "SAME",
                                         dimension_numbers=dn)
        h = jnp.maximum(h + b0.reshape(1, 1, 1, -1), 0.0)
        o = jnp.einsum("nhwc,co->nhwo", h, w1) + b1.reshape(1, 1, 1, -1)
        outs.append(o)
    y = jnp.concatenate(outs, axis=-1)
    return jnp.transpose(y, (0, 3, 1, 2))


if __name__ == "__main__":
    # Small shapes consistent with the module: N=2, Cin=16 (so m=4), 16x16 spatial.
    input_channels = 16
    head_size = [[2], [1], [2]]          # num_class = 5
    num_class = sum(sum(head_size, []))

    key = jax.random.PRNGKey(0)
    kx, kp = jax.random.split(key)
    x = jax.random.normal(kx, (2, input_channels, 16, 16), jnp.float32)  # NCHW
    params = make_params(kp, input_channels, head_size)

    y = multitask_head_forward(x, params)
    y = jax.block_until_ready(y)

    assert y.shape == (2, num_class, 16, 16), y.shape

    y_ref = reference_forward(x, params)
    assert jnp.allclose(y, y_ref, atol=1e-4, rtol=1e-4), "mismatch vs reference"

    print("KERNEL_OK")
</pallas_src>

<mosaic_0001>
module attributes {stable_mosaic.version = 11 : i64} {
  func.func @fused_multitask_head_kernel(%arg0: i32, %arg1: memref<1x16x16x16xf32, #tpu.memory_space<vmem>>, %arg2: memref<144x12xf32, #tpu.memory_space<vmem>>, %arg3: memref<1x12xf32, #tpu.memory_space<vmem>>, %arg4: memref<5x12xf32, #tpu.memory_space<vmem>>, %arg5: memref<5x1xf32, #tpu.memory_space<vmem>>, %arg6: memref<1x5x256xf32, #tpu.memory_space<vmem>>, %arg7: memref<18x18x16xf32, #tpu.memory_space<vmem>>) attributes {dimension_semantics = [#tpu.dimension_semantics<parallel>], iteration_bounds = array<i64: 2>, scalar_prefetch = 0 : i64, scratch_operands = 1 : i64, tpu.core_type = #tpu.core_type<tc>, window_params = [{transform_indices = @transform_0, window_bounds = array<i64: 1, 16, 16, 16>}, {pipeline_mode = #tpu.pipeline_mode<synchronous>, transform_indices = @transform_1, window_bounds = array<i64: 144, 12>}, {pipeline_mode = #tpu.pipeline_mode<synchronous>, transform_indices = @transform_2, window_bounds = array<i64: 1, 12>}, {pipeline_mode = #tpu.pipeline_mode<synchronous>, transform_indices = @transform_3, window_bounds = array<i64: 5, 12>}, {pipeline_mode = #tpu.pipeline_mode<synchronous>, transform_indices = @transform_4, window_bounds = array<i64: 5, 1>}, {transform_indices = @transform_5, window_bounds = array<i64: 1, 5, 256>}]} {
    %cst = arith.constant 0.000000e+00 : f32
    %0 = vector.broadcast %cst : f32 to vector<18x18x16xf32>
    %c0 = arith.constant 0 : index
    %c0_0 = arith.constant 0 : index
    %c0_1 = arith.constant 0 : index
    %1 = vector.load %arg7[%c0, %c0_0, %c0_1] : memref<18x18x16xf32, #tpu.memory_space<vmem>>, vector<18x18x16xf32>
    tpu.vector_store %arg7[%c0, %c0_0, %c0_1], %0 {strides = array<i32>} : memref<18x18x16xf32, #tpu.memory_space<vmem>>, vector<18x18x16xf32>,
    %c0_2 = arith.constant 0 : index
    %c0_3 = arith.constant 0 : index
    %c0_4 = arith.constant 0 : index
    %c0_5 = arith.constant 0 : index
    %2 = vector.load %arg1[%c0_2, %c0_3, %c0_4, %c0_5] : memref<1x16x16x16xf32, #tpu.memory_space<vmem>>, vector<1x16x16x16xf32>
    %3 = vector.shape_cast %2 : vector<1x16x16x16xf32> to vector<16x16x16xf32>
    %c1 = arith.constant 1 : index
    %c1_6 = arith.constant 1 : index
    %c0_7 = arith.constant 0 : index
    %4 = vector.load %arg7[%c1, %c1_6, %c0_7] : memref<18x18x16xf32, #tpu.memory_space<vmem>>, vector<16x16x16xf32>
    tpu.vector_store %arg7[%c1, %c1_6, %c0_7], %3 {strides = array<i32>} : memref<18x18x16xf32, #tpu.memory_space<vmem>>, vector<16x16x16xf32>,
    %c0_8 = arith.constant 0 : index
    %c0_9 = arith.constant 0 : index
    %c0_10 = arith.constant 0 : index
    %5 = vector.load %arg7[%c0_8, %c0_9, %c0_10] : memref<18x18x16xf32, #tpu.memory_space<vmem>>, vector<16x16x16xf32>
    %6 = vector.shape_cast %5 : vector<16x16x16xf32> to vector<256x16xf32>
    %c0_11 = arith.constant 0 : index
    %c1_12 = arith.constant 1 : index
    %c0_13 = arith.constant 0 : index
    %7 = vector.load %arg7[%c0_11, %c1_12, %c0_13] : memref<18x18x16xf32, #tpu.memory_space<vmem>>, vector<16x16x16xf32>
    %8 = vector.shape_cast %7 : vector<16x16x16xf32> to vector<256x16xf32>
    %c0_14 = arith.constant 0 : index
    %c2 = arith.constant 2 : index
    %c0_15 = arith.constant 0 : index
    %9 = vector.load %arg7[%c0_14, %c2, %c0_15] : memref<18x18x16xf32, #tpu.memory_space<vmem>>, vector<16x16x16xf32>
    %10 = vector.shape_cast %9 : vector<16x16x16xf32> to vector<256x16xf32>
    %c1_16 = arith.constant 1 : index
    %c0_17 = arith.constant 0 : index
    %c0_18 = arith.constant 0 : index
    %11 = vector.load %arg7[%c1_16, %c0_17, %c0_18] : memref<18x18x16xf32, #tpu.memory_space<vmem>>, vector<16x16x16xf32>
    %12 = vector.shape_cast %11 : vector<16x16x16xf32> to vector<256x16xf32>
    %c1_19 = arith.constant 1 : index
    %c1_20 = arith.constant 1 : index
    %c0_21 = arith.constant 0 : index
    %13 = vector.load %arg7[%c1_19, %c1_20, %c0_21] : memref<18x18x16xf32, #tpu.memory_space<vmem>>, vector<16x16x16xf32>
    %14 = vector.shape_cast %13 : vector<16x16x16xf32> to vector<256x16xf32>
    %c1_22 = arith.constant 1 : index
    %c2_23 = arith.constant 2 : index
    %c0_24 = arith.constant 0 : index
    %15 = vector.load %arg7[%c1_22, %c2_23, %c0_24] : memref<18x18x16xf32, #tpu.memory_space<vmem>>, vector<16x16x16xf32>
    %16 = vector.shape_cast %15 : vector<16x16x16xf32> to vector<256x16xf32>
    %c2_25 = arith.constant 2 : index
    %c0_26 = arith.constant 0 : index
    %c0_27 = arith.constant 0 : index
    %17 = vector.load %arg7[%c2_25, %c0_26, %c0_27] : memref<18x18x16xf32, #tpu.memory_space<vmem>>, vector<16x16x16xf32>
    %18 = vector.shape_cast %17 : vector<16x16x16xf32> to vector<256x16xf32>
    %c2_28 = arith.constant 2 : index
    %c1_29 = arith.constant 1 : index
    %c0_30 = arith.constant 0 : index
    %19 = vector.load %arg7[%c2_28, %c1_29, %c0_30] : memref<18x18x16xf32, #tpu.memory_space<vmem>>, vector<16x16x16xf32>
    %20 = vector.shape_cast %19 : vector<16x16x16xf32> to vector<256x16xf32>
    %c2_31 = arith.constant 2 : index
    %c2_32 = arith.constant 2 : index
    %c0_33 = arith.constant 0 : index
    %21 = vector.load %arg7[%c2_31, %c2_32, %c0_33] : memref<18x18x16xf32, #tpu.memory_space<vmem>>, vector<16x16x16xf32>
    %22 = vector.shape_cast %21 : vector<16x16x16xf32> to vector<256x16xf32>
    %23 = tpu.concatenate %6, %8, %10, %12, %14, %16, %18, %20, %22 in 1 : vector<256x16xf32>, vector<256x16xf32>, vector<256x16xf32>, vector<256x16xf32>, vector<256x16xf32>, vector<256x16xf32>, vector<256x16xf32>, vector<256x16xf32>, vector<256x16xf32> -> vector<256x144xf32>
    %c0_34 = arith.constant 0 : index
    %c0_35 = arith.constant 0 : index
    %24 = vector.load %arg2[%c0_34, %c0_35] : memref<144x12xf32, #tpu.memory_space<vmem>>, vector<144x12xf32>
    %cst_36 = arith.constant dense<0.000000e+00> : vector<256x12xf32>
    %25 = tpu.matmul %23, %24, %cst_36 {dimension_numbers = #tpu.dot_dimension_numbers<[1], [0], [0], [1], [0, 0, 1, 1], [], []>} : vector<256x144xf32>, vector<144x12xf32>, vector<256x12xf32> -> vector<256x12xf32>
    %c0_37 = arith.constant 0 : index
    %c0_38 = arith.constant 0 : index
    %26 = vector.load %arg3[%c0_37, %c0_38] : memref<1x12xf32, #tpu.memory_space<vmem>>, vector<1x12xf32>
    %27 = vector.broadcast %26 : vector<1x12xf32> to vector<256x12xf32>
    %28 = arith.addf %25, %27 : vector<256x12xf32>
    %cst_39 = arith.constant 0.000000e+00 : f32
    %29 = vector.broadcast %cst_39 : f32 to vector<256x12xf32>
    %30 = arith.maximumf %28, %29 : vector<256x12xf32>
    %c0_40 = arith.constant 0 : index
    %c0_41 = arith.constant 0 : index
    %31 = vector.load %arg4[%c0_40, %c0_41] : memref<5x12xf32, #tpu.memory_space<vmem>>, vector<5x12xf32>
    %cst_42 = arith.constant dense<0.000000e+00> : vector<5x256xf32>
    %32 = tpu.matmul %31, %30, %cst_42 {dimension_numbers = #tpu.dot_dimension_numbers<[1], [1], [0], [0], [0, 0, 1, 0], [], []>} : vector<5x12xf32>, vector<256x12xf32>, vector<5x256xf32> -> vector<5x256xf32>
    %c0_43 = arith.constant 0 : index
    %c0_44 = arith.constant 0 : index
    %33 = vector.load %arg5[%c0_43, %c0_44] : memref<5x1xf32, #tpu.memory_space<vmem>>, vector<5x1xf32>
    %34 = vector.broadcast %33 : vector<5x1xf32> to vector<5x256xf32>
    %35 = arith.addf %32, %34 : vector<5x256xf32>
    %c0_45 = arith.constant 0 : index
    %c0_46 = arith.constant 0 : index
    %c0_47 = arith.constant 0 : index
    %36 = vector.load %arg6[%c0_45, %c0_46, %c0_47] : memref<1x5x256xf32, #tpu.memory_space<vmem>>, vector<1x5x256xf32>
    %37 = vector.shape_cast %36 : vector<1x5x256xf32> to vector<5x256xf32>
    %38 = vector.shape_cast %35 : vector<5x256xf32> to vector<1x5x256xf32>
    tpu.vector_store %arg6[%c0_45, %c0_46, %c0_47], %38 {strides = array<i32>} : memref<1x5x256xf32, #tpu.memory_space<vmem>>, vector<1x5x256xf32>,
    return
  }
  func.func @transform_0(%arg0: i32) -> (i32, i32, i32, i32) {
    %c0_i32 = arith.constant 0 : i32
    %c0_i32_0 = arith.constant 0 : i32
    %c0_i32_1 = arith.constant 0 : i32
    %c0_i32_2 = arith.constant 0 : i32
    return %arg0, %c0_i32, %c0_i32_0, %c0_i32_1 : i32, i32, i32, i32
  }
  func.func @transform_1(%arg0: i32) -> (i32, i32) {
    %c0_i32 = arith.constant 0 : i32
    %c0_i32_0 = arith.constant 0 : i32
    %c0_i32_1 = arith.constant 0 : i32
    return %c0_i32, %c0_i32_0 : i32, i32
  }
  func.func @transform_2(%arg0: i32) -> (i32, i32) {
    %c0_i32 = arith.constant 0 : i32
    %c0_i32_0 = arith.constant 0 : i32
    %c0_i32_1 = arith.constant 0 : i32
    return %c0_i32, %c0_i32_0 : i32, i32
  }
  func.func @transform_3(%arg0: i32) -> (i32, i32) {
    %c0_i32 = arith.constant 0 : i32
    %c0_i32_0 = arith.constant 0 : i32
    %c0_i32_1 = arith.constant 0 : i32
    return %c0_i32, %c0_i32_0 : i32, i32
  }
  func.func @transform_4(%arg0: i32) -> (i32, i32) {
    %c0_i32 = arith.constant 0 : i32
    %c0_i32_0 = arith.constant 0 : i32
    %c0_i32_1 = arith.constant 0 : i32
    return %c0_i32, %c0_i32_0 : i32, i32
  }
  func.func @transform_5(%arg0: i32) -> (i32, i32, i32) {
    %c0_i32 = arith.constant 0 : i32
    %c0_i32_0 = arith.constant 0 : i32
    %c0_i32_1 = arith.constant 0 : i32
    return %arg0, %c0_i32, %c0_i32_0 : i32, i32, i32
  }
}

</mosaic_0001>

<llo_original>
// kernel: tpu_custom_call.1
$region0: #{tpu_custom_call.1}
  #allocation0 [shape = 'u32[]', space=smem, size = 0x4, offset = 0x4, fixed_abs, tag = 'smem constant byte address 0x4 - core index']
  #allocation1 [shape = 'u32[144,128]{1,0:T(1,128)}', space=vmem, size = 0x12000, scoped, tag = 'internal scratch']
  #allocation2 [shape = 'f32[18,18,16]{2,1,0:T(8,128)}', space=vmem, size = 0x36000, scoped, tag = 'scratch operand']
  %s0 = inlined_call_operand.hbm [shape: f32[2,16,16,16], index: 0, kind: input, shape index: {}]
  %s1 = inlined_call_operand.vmem [shape: f32[144,12], index: 1, kind: input, shape index: {}]
  %s2 = inlined_call_operand.vmem [shape: f32[1,12], index: 2, kind: input, shape index: {}]
  %s3 = inlined_call_operand.vmem [shape: f32[5,12], index: 3, kind: input, shape index: {}]
  %s4 = inlined_call_operand.vmem [shape: f32[5,1], index: 4, kind: input, shape index: {}]
  %s5 = inlined_call_operand.vmem [shape: f32[2,5,256], index: 5, kind: output, shape index: {}]
  %s6 = sld [smem:[#allocation0]]
  $region57: #{tpu_custom_call.1} parent=0
    _
  %s8 = ssub.s32 1, %s6
  %s9 = scalar_select 0, %s8, %s6
  $region1: #{tpu_custom_call.1} parent=0
    #allocation3 [shape = 'u8[262144]{0}', space=vmem, size = 0x40000, scoped, tag = 'input window, operand 0']
    #allocation4 [shape = 's32[2]{0}', space=sflag, size = 0x8, scoped, tag = 'scoped memory for tpu_custom_call.1']
    %10 = vsyncpa [#allocation4], 0
    %s11 = scalar_lea.sflag [#allocation4], 1
    %12 = vsyncpa %s11, 0
    loop: start=0, step=1, limit=4
    $region2: #{tpu_custom_call.1} parent=1 // loop_pre_header
      _
    $region3: #{tpu_custom_call.1} parent=1 // loop_header
      %s14 = sphi 0, %s18
      %p15 = scmp.ge.s32.totalorder %s14, 4
      %s24 = sphi 0, %s26
      %s27 = sphi 0, %s24
      %s28 = sphi 0, %s27
      %s44 = sphi 0, %s28
      %s48 = sphi 0, %s48
      %s50 = sphi 0, %s48
      %s51 = sphi 0, %s50
      %s65 = sphi 0, %s51
      %s69 = sphi 0, %s69
      %s71 = sphi 0, %s69
      %s72 = sphi 0, %s71
      %s86 = sphi 0, %s72
      %s90 = sphi 0, %s90
      %s92 = sphi 0, %s90
      %s93 = sphi 0, %s92
      %s107 = sphi 0, %s93
      %s111 = sphi 0, %s111
      %s113 = sphi 0, %s111
      %s114 = sphi 0, %s113
      %s128 = sphi 0, %s114
      %s134 = sphi 0, %s136
      %s137 = sphi 0, %s134
      %s138 = sphi 0, %s137
      %s154 = sphi 0, %s138
    $region4: #{tpu_custom_call.1} parent=1 // loop_header_branch
      %17 = sbr.rel (%p15) target = $region8
    $region5: #{tpu_custom_call.1} parent=1 // loop_body
      %s19 = ssub.s32 %s14, 1
      %s20 = ssub.s32 %s14, 2
      %s21 = sadd.s32 %s14, 1
      %s22 = ssub.s32 %s14, %s21
      %p23 = scmp.eq.s32.totalorder %s22, 0
      %s25 = sadd.s32 %s24, 1
      %s26 = scalar_select %p23, %s24, %s25
      %p29 = pneg %p23
      %p30 = scmp.eq.s32.totalorder %s14, 1
      %p31 = por %p29, %p30
      %p32 = scmp.ne.s32.totalorder %s24, %s27
      %p33 = scmp.eq.s32.totalorder %s14, 0
      %p34 = por %p32, %p33
      %p35 = scmp.ne.s32.totalorder %s24, %s27
      %p36 = scmp.eq.s32.totalorder %s19, 1
      %p37 = por %p35, %p36
      %p38 = scmp.ne.s32.totalorder %s27, %s28
      %p39 = scmp.eq.s32.totalorder %s19, 0
      %p40 = por %p38, %p39
      %p41 = scmp.ne.s32.totalorder %s27, %s28
      %p42 = scmp.eq.s32.totalorder %s20, 1
      %p43 = por %p41, %p42
      %p45 = scmp.ne.s32.totalorder %s28, %s44
      %p46 = scmp.eq.s32.totalorder %s20, 0
      %p47 = por %p45, %p46
      %s49 = sadd.s32 %s48, 1
      %p52 = scmp.eq.s32.totalorder %s14, 1
      %p53 = scmp.ne.s32.totalorder %s48, %s50
      %p54 = scmp.eq.s32.totalorder %s14, 0
      %p55 = por %p53, %p54
      %p56 = scmp.ne.s32.totalorder %s48, %s50
      %p57 = scmp.eq.s32.totalorder %s19, 1
      %p58 = por %p56, %p57
      %p59 = scmp.ne.s32.totalorder %s50, %s51
      %p60 = scmp.eq.s32.totalorder %s19, 0
      %p61 = por %p59, %p60
      %p62 = scmp.ne.s32.totalorder %s50, %s51
      %p63 = scmp.eq.s32.totalorder %s20, 1
      %p64 = por %p62, %p63
      %p66 = scmp.ne.s32.totalorder %s51, %s65
      %p67 = scmp.eq.s32.totalorder %s20, 0
      %p68 = por %p66, %p67
      %s70 = sadd.s32 %s69, 1
      %p73 = scmp.eq.s32.totalorder %s14, 1
      %p74 = scmp.ne.s32.totalorder %s69, %s71
      %p75 = scmp.eq.s32.totalorder %s14, 0
      %p76 = por %p74, %p75
      %p77 = scmp.ne.s32.totalorder %s69, %s71
      %p78 = scmp.eq.s32.totalorder %s19, 1
      %p79 = por %p77, %p78
      %p80 = scmp.ne.s32.totalorder %s71, %s72
      %p81 = scmp.eq.s32.totalorder %s19, 0
      %p82 = por %p80, %p81
      %p83 = scmp.ne.s32.totalorder %s71, %s72
      %p84 = scmp.eq.s32.totalorder %s20, 1
      %p85 = por %p83, %p84
      %p87 = scmp.ne.s32.totalorder %s72, %s86
      %p88 = scmp.eq.s32.totalorder %s20, 0
      %p89 = por %p87, %p88
      %s91 = sadd.s32 %s90, 1
      %p94 = scmp.eq.s32.totalorder %s14, 1
      %p95 = scmp.ne.s32.totalorder %s90, %s92
      %p96 = scmp.eq.s32.totalorder %s14, 0
      %p97 = por %p95, %p96
      %p98 = scmp.ne.s32.totalorder %s90, %s92
      %p99 = scmp.eq.s32.totalorder %s19, 1
      %p100 = por %p98, %p99
      %p101 = scmp.ne.s32.totalorder %s92, %s93
      %p102 = scmp.eq.s32.totalorder %s19, 0
      %p103 = por %p101, %p102
      %p104 = scmp.ne.s32.totalorder %s92, %s93
      %p105 = scmp.eq.s32.totalorder %s20, 1
      %p106 = por %p104, %p105
      %p108 = scmp.ne.s32.totalorder %s93, %s107
      %p109 = scmp.eq.s32.totalorder %s20, 0
      %p110 = por %p108, %p109
      %s112 = sadd.s32 %s111, 1
      %p115 = scmp.eq.s32.totalorder %s14, 1
      %p116 = scmp.ne.s32.totalorder %s111, %s113
      %p117 = scmp.eq.s32.totalorder %s14, 0
      %p118 = por %p116, %p117
      %p119 = scmp.ne.s32.totalorder %s111, %s113
      %p120 = scmp.eq.s32.totalorder %s19, 1
      %p121 = por %p119, %p120
      %p122 = scmp.ne.s32.totalorder %s113, %s114
      %p123 = scmp.eq.s32.totalorder %s19, 0
      %p124 = por %p122, %p123
      %p125 = scmp.ne.s32.totalorder %s113, %s114
      %p126 = scmp.eq.s32.totalorder %s20, 1
      %p127 = por %p125, %p126
      %p129 = scmp.ne.s32.totalorder %s114, %s128
      %p130 = scmp.eq.s32.totalorder %s20, 0
      %p131 = por %p129, %p130
      %s132 = ssub.s32 %s14, %s21
      %p133 = scmp.eq.s32.totalorder %s132, 0
      %s135 = sadd.s32 %s134, 1
      %s136 = scalar_select %p133, %s134, %s135
      %p139 = pneg %p133
      %p140 = scmp.eq.s32.totalorder %s14, 1
      %p141 = por %p139, %p140
      %p142 = scmp.ne.s32.totalorder %s134, %s137
      %p143 = scmp.eq.s32.totalorder %s14, 0
      %p144 = por %p142, %p143
      %p145 = scmp.ne.s32.totalorder %s134, %s137
      %p146 = scmp.eq.s32.totalorder %s19, 1
      %p147 = por %p145, %p146
      %p148 = scmp.ne.s32.totalorder %s137, %s138
      %p149 = scmp.eq.s32.totalorder %s19, 0
      %p150 = por %p148, %p149
      %p151 = scmp.ne.s32.totalorder %s137, %s138
      %p152 = scmp.eq.s32.totalorder %s20, 1
      %p153 = por %p151, %p152
      %p155 = scmp.ne.s32.totalorder %s138, %s154
      %p156 = scmp.eq.s32.totalorder %s20, 0
      %p157 = por %p155, %p156
      %p158 = scmp.le.s32.totalorder 1, %s14
      %p159 = scmp.lt.s32.totalorder %s14, 3
      %p160 = pnand %p158, %p159
      %p161 = pneg %p160
      // Predicated region
      $region9: #{tpu_custom_call.1} parent=5 // pred_check
        _
      $region10: #{tpu_custom_call.1} parent=5 // pred_check_branch
        %163 = sbr.rel (%p160) target = $region12
      $region11: #{tpu_custom_call.1} parent=5 // pred_region
        %s164 = ssub.s32 %s14, 1
        // Predicated region
        $region13: #{tpu_custom_call.1} parent=11 // pred_check
          %p165 = pneg %p61
        $region14: #{tpu_custom_call.1} parent=11 // pred_check_branch
          %167 = sbr.rel (%p165) target = $region16
        $region15: #{tpu_custom_call.1} parent=11 // pred_region
          _
        $region16: #{tpu_custom_call.1} parent=11 // pred_fallthru
          _
        // Predicated region
        $region17: #{tpu_custom_call.1} parent=11 // pred_check
          %p168 = pneg %p82
        $region18: #{tpu_custom_call.1} parent=11 // pred_check_branch
          %170 = sbr.rel (%p168) target = $region20
        $region19: #{tpu_custom_call.1} parent=11 // pred_region
          _
        $region20: #{tpu_custom_call.1} parent=11 // pred_fallthru
          _
        // Predicated region
        $region21: #{tpu_custom_call.1} parent=11 // pred_check
          %p171 = pneg %p103
        $region22: #{tpu_custom_call.1} parent=11 // pred_check_branch
          %173 = sbr.rel (%p171) target = $region24
        $region23: #{tpu_custom_call.1} parent=11 // pred_region
          _
        $region24: #{tpu_custom_call.1} parent=11 // pred_fallthru
          _
        // Predicated region
        $region25: #{tpu_custom_call.1} parent=11 // pred_check
          %p174 = pneg %p124
        $region26: #{tpu_custom_call.1} parent=11 // pred_check_branch
          %176 = sbr.rel (%p174) target = $region28
        $region27: #{tpu_custom_call.1} parent=11 // pred_region
          _
        $region28: #{tpu_custom_call.1} parent=11 // pred_fallthru
          _
      $region12: #{tpu_custom_call.1} parent=5 // pred_fallthru
        _
      %p177 = scmp.lt.s32.totalorder %s14, 2
      // Predicated region
      $region29: #{tpu_custom_call.1} parent=5 // pred_check
        %p178 = pneg %p177
      $region30: #{tpu_custom_call.1} parent=5 // pred_check_branch
        %180 = sbr.rel (%p178) target = $region32
      $region31: #{tpu_custom_call.1} parent=5 // pred_region
        // Predicated region
        $region33: #{tpu_custom_call.1} parent=31 // pred_check
          %p181 = pneg %p34
        $region34: #{tpu_custom_call.1} parent=31 // pred_check_branch
          %183 = sbr.rel (%p181) target = $region36
        $region35: #{tpu_custom_call.1} parent=31 // pred_region
          %s184 = sand.u32 %s24, 1
          %s185 = scalar_lea.sflag [#allocation4], %s184
          %s186 = sand.u32 %s24, 1
          %s187 = smul.addr %s186, 256
          %s188 = scalar_lea.vmem [#allocation3], %s187
          %s190 = ssub.s32 4096, 4096
          %191 = vsyncadd %s185, %s190
          %s192 = smul.addr %s14, 32
          %s193 = smul.addr %s192, 128
          %s194 = scalar_lea.hbm %s0, %s193
          %s195 = sshll.u32 %s188, 4
          %s196 = int_to_ptr.vmem [resolvable:$true] %s195
          %201 = dma.hbm_to_vmem [thread:$0]  %s194, 4096, %s196, %s185, 128, 128, 8
        $region36: #{tpu_custom_call.1} parent=31 // pred_fallthru
          _
      $region32: #{tpu_custom_call.1} parent=5 // pred_fallthru
        _
      %p202 = scmp.le.s32.totalorder 1, %s14
      %p203 = scmp.lt.s32.totalorder %s14, 3
      %p204 = pnand %p202, %p203
      %p205 = pneg %p204
      // Predicated region
      $region37: #{tpu_custom_call.1} parent=5 // pred_check
        _
      $region38: #{tpu_custom_call.1} parent=5 // pred_check_branch
        %207 = sbr.rel (%p204) target = $region40
      $region39: #{tpu_custom_call.1} parent=5 // pred_region
        %s208 = ssub.s32 %s14, 1
        %s209 = sand.u32 %s27, 1
        %s210 = scalar_lea.sflag [#allocation4], %s209
        %s211 = sand.u32 %s27, 1
        %s212 = smul.addr %s211, 256
        %s213 = scalar_lea.vmem [#allocation3], %s212
        // Predicated region
        $region41: #{tpu_custom_call.1} parent=39 // pred_check
          %p214 = pneg %p40
        $region42: #{tpu_custom_call.1} parent=39 // pred_check_branch
          %216 = sbr.rel (%p214) target = $region44
        $region43: #{tpu_custom_call.1} parent=39 // pred_region
          %217 = dma.done %s210, 4096
        $region44: #{tpu_custom_call.1} parent=39 // pred_fallthru
          _
        %s218 = sand.u32 %s27, 1
        %s219 = scalar_lea.sflag [#allocation4], %s218
        %s220 = sand.u32 %s27, 1
        %s221 = smul.addr %s220, 256
        %s222 = scalar_lea.vmem [#allocation3], %s221
        %p223 = pneg %p40
        %p224 = pneg %p37
        %p225 = pneg %p61
        %p226 = pneg %p58
        %p227 = pneg %p82
        %p228 = pneg %p79
        %p229 = pneg %p103
        %p230 = pneg %p100
        %p231 = pneg %p124
        %p232 = pneg %p121
        %p233 = pneg %p150
        %p234 = pneg %p147
        %p235 = scmp.lt.s32.totalorder %s19, 1
        %s236 = scalar_select %p235, %s19, 1
        %s237 = smul.addr %s236, 2
        %s238 = smul.addr %s237, 8
        %s239 = scalar_lea.vmem %s5, %s238
        %p240 = scmp.lt.s32.totalorder %s19, 1
        %s241 = scalar_select %p240, %s19, 1
        %s242 = smul.addr %s241, 2
        %s243 = smul.addr %s242, 8
        %s244 = scalar_lea.vmem %s5, %s243
        %vm245 = vcmask 130048
        %246 = vst.msk [vmem:[#allocation2] sm:$0xff] %vm245, 0.0
        %247 = vst.msk [vmem:[#allocation2 + $0x8] sm:$0xff] %vm245, 0.0
        %vm248 = vcmask 123904
        %249 = vst.msk [vmem:[#allocation2 + $0x10] sm:$0x3] %vm248, 0.0
        %250 = vst.msk [vmem:[#allocation2 + $0x18] sm:$0xff] %vm245, 0.0
        %251 = vst.msk [vmem:[#allocation2 + $0x20] sm:$0xff] %vm245, 0.0
        %252 = vst.msk [vmem:[#allocation2 + $0x28] sm:$0x3] %vm248, 0.0
        %253 = vst.msk [vmem:[#allocation2 + $0x30] sm:$0xff] %vm245, 0.0
        %254 = vst.msk [vmem:[#allocation2 + $0x38] sm:$0xff] %vm245, 0.0
        %255 = vst.msk [vmem:[#allocation2 + $0x40] sm:$0x3] %vm248, 0.0
        %256 = vst.msk [vmem:[#allocation2 + $0x48] sm:$0xff] %vm245, 0.0
        %257 = vst.msk [vmem:[#allocation2 + $0x50] sm:$0xff] %vm245, 0.0
        %258 = vst.msk [vmem:[#allocation2 + $0x58] sm:$0x3] %vm248, 0.0
        %259 = vst.msk [vmem:[#allocation2 + $0x60] sm:$0xff] %vm245, 0.0
        %260 = vst.msk [vmem:[#allocation2 + $0x68] sm:$0xff] %vm245, 0.0
        %261 = vst.msk [vmem:[#allocation2 + $0x70] sm:$0x3] %vm248, 0.0
        %262 = vst.msk [vmem:[#allocation2 + $0x78] sm:$0xff] %vm245, 0.0
        %263 = vst.msk [vmem:[#allocation2 + $0x80] sm:$0xff] %vm245, 0.0
        %264 = vst.msk [vmem:[#allocation2 + $0x88] sm:$0x3] %vm248, 0.0
        %265 = vst.msk [vmem:[#allocation2 + $0x90] sm:$0xff] %vm245, 0.0
        %266 = vst.msk [vmem:[#allocation2 + $0x98] sm:$0xff] %vm245, 0.0
        %267 = vst.msk [vmem:[#allocation2 + $0xa0] sm:$0x3] %vm248, 0.0
        %268 = vst.msk [vmem:[#allocation2 + $0xa8] sm:$0xff] %vm245, 0.0
        %269 = vst.msk [vmem:[#allocation2 + $0xb0] sm:$0xff] %vm245, 0.0
        %270 = vst.msk [vmem:[#allocation2 + $0xb8] sm:$0x3] %vm248, 0.0
        %271 = vst.msk [vmem:[#allocation2 + $0xc0] sm:$0xff] %vm245, 0.0
        %272 = vst.msk [vmem:[#allocation2 + $0xc8] sm:$0xff] %vm245, 0.0
        %273 = vst.msk [vmem:[#allocation2 + $0xd0] sm:$0x3] %vm248, 0.0
        %274 = vst.msk [vmem:[#allocation2 + $0xd8] sm:$0xff] %vm245, 0.0
        %275 = vst.msk [vmem:[#allocation2 + $0xe0] sm:$0xff] %vm245, 0.0
        %276 = vst.msk [vmem:[#allocation2 + $0xe8] sm:$0x3] %vm248, 0.0
        %277 = vst.msk [vmem:[#allocation2 + $0xf0] sm:$0xff] %vm245, 0.0
        %278 = vst.msk [vmem:[#allocation2 + $0xf8] sm:$0xff] %vm245, 0.0
        %279 = vst.msk [vmem:[#allocation2 + $0x100] sm:$0x3] %vm248, 0.0
        %280 = vst.msk [vmem:[#allocation2 + $0x108] sm:$0xff] %vm245, 0.0
        %281 = vst.msk [vmem:[#allocation2 + $0x110] sm:$0xff] %vm245, 0.0
        %282 = vst.msk [vmem:[#allocation2 + $0x118] sm:$0x3] %vm248, 0.0
        %283 = vst.msk [vmem:[#allocation2 + $0x120] sm:$0xff] %vm245, 0.0
        %284 = vst.msk [vmem:[#allocation2 + $0x128] sm:$0xff] %vm245, 0.0
        %285 = vst.msk [vmem:[#allocation2 + $0x130] sm:$0x3] %vm248, 0.0
        %286 = vst.msk [vmem:[#allocation2 + $0x138] sm:$0xff] %vm245, 0.0
        %287 = vst.msk [vmem:[#allocation2 + $0x140] sm:$0xff] %vm245, 0.0
        %288 = vst.msk [vmem:[#allocation2 + $0x148] sm:$0x3] %vm248, 0.0
        %289 = vst.msk [vmem:[#allocation2 + $0x150] sm:$0xff] %vm245, 0.0
        %290 = vst.msk [vmem:[#allocation2 + $0x158] sm:$0xff] %vm245, 0.0
        %291 = vst.msk [vmem:[#allocation2 + $0x160] sm:$0x3] %vm248, 0.0
        %292 = vst.msk [vmem:[#allocation2 + $0x168] sm:$0xff] %vm245, 0.0
        %293 = vst.msk [vmem:[#allocation2 + $0x170] sm:$0xff] %vm245, 0.0
        %294 = vst.msk [vmem:[#allocation2 + $0x178] sm:$0x3] %vm248, 0.0
        %295 = vst.msk [vmem:[#allocation2 + $0x180] sm:$0xff] %vm245, 0.0
        %296 = vst.msk [vmem:[#allocation2 + $0x188] sm:$0xff] %vm245, 0.0
        %297 = vst.msk [vmem:[#allocation2 + $0x190] sm:$0x3] %vm248, 0.0
        %298 = vst.msk [vmem:[#allocation2 + $0x198] sm:$0xff] %vm245, 0.0
        %299 = vst.msk [vmem:[#allocation2 + $0x1a0] sm:$0xff] %vm245, 0.0
        %300 = vst.msk [vmem:[#allocation2 + $0x1a8] sm:$0x3] %vm248, 0.0
        %v301 = vld [vmem:[%s213] sm:$0xff]
        %v302 = vld [vmem:[%s213 + $0x8] sm:$0xff]
        %v303 = vld [vmem:[%s213 + $0x10] sm:$0xff]
        %v304 = vld [vmem:[%s213 + $0x18] sm:$0xff]
        %v305 = vld [vmem:[%s213 + $0x20] sm:$0xff]
        %v306 = vld [vmem:[%s213 + $0x28] sm:$0xff]
        %v307 = vld [vmem:[%s213 + $0x30] sm:$0xff]
        %v308 = vld [vmem:[%s213 + $0x38] sm:$0xff]
        %v309 = vld [vmem:[%s213 + $0x40] sm:$0xff]
        %v310 = vld [vmem:[%s213 + $0x48] sm:$0xff]
        %v311 = vld [vmem:[%s213 + $0x50] sm:$0xff]
        %v312 = vld [vmem:[%s213 + $0x58] sm:$0xff]
        %v313 = vld [vmem:[%s213 + $0x60] sm:$0xff]
        %v314 = vld [vmem:[%s213 + $0x68] sm:$0xff]
        %v315 = vld [vmem:[%s213 + $0x70] sm:$0xff]
        %v316 = vld [vmem:[%s213 + $0x78] sm:$0xff]
        %v317 = vld [vmem:[%s213 + $0x80] sm:$0xff]
        %v318 = vld [vmem:[%s213 + $0x88] sm:$0xff]
        %v319 = vld [vmem:[%s213 + $0x90] sm:$0xff]
        %v320 = vld [vmem:[%s213 + $0x98] sm:$0xff]
        %v321 = vld [vmem:[%s213 + $0xa0] sm:$0xff]
        %v322 = vld [vmem:[%s213 + $0xa8] sm:$0xff]
        %v323 = vld [vmem:[%s213 + $0xb0] sm:$0xff]
        %v324 = vld [vmem:[%s213 + $0xb8] sm:$0xff]
        %v325 = vld [vmem:[%s213 + $0xc0] sm:$0xff]
        %v326 = vld [vmem:[%s213 + $0xc8] sm:$0xff]
        %v327 = vld [vmem:[%s213 + $0xd0] sm:$0xff]
        %v328 = vld [vmem:[%s213 + $0xd8] sm:$0xff]
        %v329 = vld [vmem:[%s213 + $0xe0] sm:$0xff]
        %v330 = vld [vmem:[%s213 + $0xe8] sm:$0xff]
        %v331 = vld [vmem:[%s213 + $0xf0] sm:$0xff]
        %v332 = vld [vmem:[%s213 + $0xf8] sm:$0xff]
        %s333 = scalar_lea.vmem [#allocation2], 24
        %334 = vst.msk [vmem:[%s333 + $0x1] sm:$0xff] %vm245, %v301
        %335 = vst.msk [vmem:[%s333 + $0x9] sm:$0xff] %vm245, %v302
        %336 = vst.msk [vmem:[%s333 + $0x19] sm:$0xff] %vm245, %v303
        %337 = vst.msk [vmem:[%s333 + $0x21] sm:$0xff] %vm245, %v304
        %338 = vst.msk [vmem:[%s333 + $0x31] sm:$0xff] %vm245, %v305
        %339 = vst.msk [vmem:[%s333 + $0x39] sm:$0xff] %vm245, %v306
        %340 = vst.msk [vmem:[%s333 + $0x49] sm:$0xff] %vm245, %v307
        %341 = vst.msk [vmem:[%s333 + $0x51] sm:$0xff] %vm245, %v308
        %342 = vst.msk [vmem:[%s333 + $0x61] sm:$0xff] %vm245, %v309
        %343 = vst.msk [vmem:[%s333 + $0x69] sm:$0xff] %vm245, %v310
        %344 = vst.msk [vmem:[%s333 + $0x79] sm:$0xff] %vm245, %v311
        %345 = vst.msk [vmem:[%s333 + $0x81] sm:$0xff] %vm245, %v312
        %346 = vst.msk [vmem:[%s333 + $0x91] sm:$0xff] %vm245, %v313
        %347 = vst.msk [vmem:[%s333 + $0x99] sm:$0xff] %vm245, %v314
        %348 = vst.msk [vmem:[%s333 + $0xa9] sm:$0xff] %vm245, %v315
        %349 = vst.msk [vmem:[%s333 + $0xb1] sm:$0xff] %vm245, %v316
        %350 = vst.msk [vmem:[%s333 + $0xc1] sm:$0xff] %vm245, %v317
        %351 = vst.msk [vmem:[%s333 + $0xc9] sm:$0xff] %vm245, %v318
        %352 = vst.msk [vmem:[%s333 + $0xd9] sm:$0xff] %vm245, %v319
        %353 = vst.msk [vmem:[%s333 + $0xe1] sm:$0xff] %vm245, %v320
        %354 = vst.msk [vmem:[%s333 + $0xf1] sm:$0xff] %vm245, %v321
        %355 = vst.msk [vmem:[%s333 + $0xf9] sm:$0xff] %vm245, %v322
        %356 = vst.msk [vmem:[%s333 + $0x109] sm:$0xff] %vm245, %v323
        %357 = vst.msk [vmem:[%s333 + $0x111] sm:$0xff] %vm245, %v324
        %358 = vst.msk [vmem:[%s333 + $0x121] sm:$0xff] %vm245, %v325
        %359 = vst.msk [vmem:[%s333 + $0x129] sm:$0xff] %vm245, %v326
        %360 = vst.msk [vmem:[%s333 + $0x139] sm:$0xff] %vm245, %v327
        %361 = vst.msk [vmem:[%s333 + $0x141] sm:$0xff] %vm245, %v328
        %362 = vst.msk [vmem:[%s333 + $0x151] sm:$0xff] %vm245, %v329
        %363 = vst.msk [vmem:[%s333 + $0x159] sm:$0xff] %vm245, %v330
        %364 = vst.msk [vmem:[%s333 + $0x169] sm:$0xff] %vm245, %v331
        %365 = vst.msk [vmem:[%s333 + $0x171] sm:$0xff] %vm245, %v332
        %v366 = vld [vmem:[#allocation2] sm:$0xff]
        %v367 = vld [vmem:[#allocation2 + $0x8] sm:$0xff]
        %v368 = vld [vmem:[#allocation2 + $0x18] sm:$0xff]
        %v369 = vld [vmem:[#allocation2 + $0x20] sm:$0xff]
        %v370 = vld [vmem:[#allocation2 + $0x30] sm:$0xff]
        %v371 = vld [vmem:[#allocation2 + $0x38] sm:$0xff]
        %v372 = vld [vmem:[#allocation2 + $0x48] sm:$0xff]
        %v373 = vld [vmem:[#allocation2 + $0x50] sm:$0xff]
        %v374 = vld [vmem:[#allocation2 + $0x60] sm:$0xff]
        %v375 = vld [vmem:[#allocation2 + $0x68] sm:$0xff]
        %v376 = vld [vmem:[#allocation2 + $0x78] sm:$0xff]
        %v377 = vld [vmem:[#allocation2 + $0x80] sm:$0xff]
        %v378 = vld [vmem:[#allocation2 + $0x90] sm:$0xff]
        %v379 = vld [vmem:[#allocation2 + $0x98] sm:$0xff]
        %v380 = vld [vmem:[#allocation2 + $0xa8] sm:$0xff]
        %v381 = vld [vmem:[#allocation2 + $0xb0] sm:$0xff]
        %v382 = vld [vmem:[#allocation2 + $0xc0] sm:$0xff]
        %v383 = vld [vmem:[#allocation2 + $0xc8] sm:$0xff]
        %v384 = vld [vmem:[#allocation2 + $0xd8] sm:$0xff]
        %v385 = vld [vmem:[#allocation2 + $0xe0] sm:$0xff]
        %v386 = vld [vmem:[#allocation2 + $0xf0] sm:$0xff]
        %v387 = vld [vmem:[#allocation2 + $0xf8] sm:$0xff]
        %v388 = vld [vmem:[#allocation2 + $0x108] sm:$0xff]
        %v389 = vld [vmem:[#allocation2 + $0x110] sm:$0xff]
        %v390 = vld [vmem:[#allocation2 + $0x120] sm:$0xff]
        %v391 = vld [vmem:[#allocation2 + $0x128] sm:$0xff]
        %v392 = vld [vmem:[#allocation2 + $0x138] sm:$0xff]
        %v393 = vld [vmem:[#allocation2 + $0x140] sm:$0xff]
        %v394 = vld [vmem:[#allocation2 + $0x150] sm:$0xff]
        %v395 = vld [vmem:[#allocation2 + $0x158] sm:$0xff]
        %v396 = vld [vmem:[#allocation2 + $0x168] sm:$0xff]
        %v397 = vld [vmem:[#allocation2 + $0x170] sm:$0xff]
        %v398 = vld [vmem:[#allocation2 + $0x1] sm:$0xff]
        %v399 = vld [vmem:[#allocation2 + $0x9] sm:$0xff]
        %v400 = vld [vmem:[#allocation2 + $0x19] sm:$0xff]
        %v401 = vld [vmem:[#allocation2 + $0x21] sm:$0xff]
        %v402 = vld [vmem:[#allocation2 + $0x31] sm:$0xff]
        %v403 = vld [vmem:[#allocation2 + $0x39] sm:$0xff]
        %v404 = vld [vmem:[#allocation2 + $0x49] sm:$0xff]
        %v405 = vld [vmem:[#allocation2 + $0x51] sm:$0xff]
        %v406 = vld [vmem:[#allocation2 + $0x61] sm:$0xff]
        %v407 = vld [vmem:[#allocation2 + $0x69] sm:$0xff]
        %v408 = vld [vmem:[#allocation2 + $0x79] sm:$0xff]
        %v409 = vld [vmem:[#allocation2 + $0x81] sm:$0xff]
        %v410 = vld [vmem:[#allocation2 + $0x91] sm:$0xff]
        %v411 = vld [vmem:[#allocation2 + $0x99] sm:$0xff]
        %v412 = vld [vmem:[#allocation2 + $0xa9] sm:$0xff]
        %v413 = vld [vmem:[#allocation2 + $0xb1] sm:$0xff]
        %v414 = vld [vmem:[#allocation2 + $0xc1] sm:$0xff]
        %v415 = vld [vmem:[#allocation2 + $0xc9] sm:$0xff]
        %v416 = vld [vmem:[#allocation2 + $0xd9] sm:$0xff]
        %v417 = vld [vmem:[#allocation2 + $0xe1] sm:$0xff]
        %v418 = vld [vmem:[#allocation2 + $0xf1] sm:$0xff]
        %v419 = vld [vmem:[#allocation2 + $0xf9] sm:$0xff]
        %v420 = vld [vmem:[#allocation2 + $0x109] sm:$0xff]
        %v421 = vld [vmem:[#allocation2 + $0x111] sm:$0xff]
        %v422 = vld [vmem:[#allocation2 + $0x121] sm:$0xff]
        %v423 = vld [vmem:[#allocation2 + $0x129] sm:$0xff]
        %v424 = vld [vmem:[#allocation2 + $0x139] sm:$0xff]
        %v425 = vld [vmem:[#allocation2 + $0x141] sm:$0xff]
        %v426 = vld [vmem:[#allocation2 + $0x151] sm:$0xff]
        %v427 = vld [vmem:[#allocation2 + $0x159] sm:$0xff]
        %v428 = vld [vmem:[#allocation2 + $0x169] sm:$0xff]
        %v429 = vld [vmem:[#allocation2 + $0x171] sm:$0xff]
        %v430 = vld [vmem:[#allocation2 + $0x2] sm:$0xff]
        %v431 = vld [vmem:[#allocation2 + $0xa] sm:$0xff]
        %v432 = vld [vmem:[#allocation2 + $0x1a] sm:$0xff]
        %v433 = vld [vmem:[#allocation2 + $0x22] sm:$0xff]
        %v434 = vld [vmem:[#allocation2 + $0x32] sm:$0xff]
        %v435 = vld [vmem:[#allocation2 + $0x3a] sm:$0xff]
        %v436 = vld [vmem:[#allocation2 + $0x4a] sm:$0xff]
        %v437 = vld [vmem:[#allocation2 + $0x52] sm:$0xff]
        %v438 = vld [vmem:[#allocation2 + $0x62] sm:$0xff]
        %v439 = vld [vmem:[#allocation2 + $0x6a] sm:$0xff]
        %v440 = vld [vmem:[#allocation2 + $0x7a] sm:$0xff]
        %v441 = vld [vmem:[#allocation2 + $0x82] sm:$0xff]
        %v442 = vld [vmem:[#allocation2 + $0x92] sm:$0xff]
        %v443 = vld [vmem:[#allocation2 + $0x9a] sm:$0xff]
        %v444 = vld [vmem:[#allocation2 + $0xaa] sm:$0xff]
        %v445 = vld [vmem:[#allocation2 + $0xb2] sm:$0xff]
        %v446 = vld [vmem:[#allocation2 + $0xc2] sm:$0xff]
        %v447 = vld [vmem:[#allocation2 + $0xca] sm:$0xff]
        %v448 = vld [vmem:[#allocation2 + $0xda] sm:$0xff]
        %v449 = vld [vmem:[#allocation2 + $0xe2] sm:$0xff]
        %v450 = vld [vmem:[#allocation2 + $0xf2] sm:$0xff]
        %v451 = vld [vmem:[#allocation2 + $0xfa] sm:$0xff]
        %v452 = vld [vmem:[#allocation2 + $0x10a] sm:$0xff]
        %v453 = vld [vmem:[#allocation2 + $0x112] sm:$0xff]
        %v454 = vld [vmem:[#allocation2 + $0x122] sm:$0xff]
        %v455 = vld [vmem:[#allocation2 + $0x12a] sm:$0xff]
        %v456 = vld [vmem:[#allocation2 + $0x13a] sm:$0xff]
        %v457 = vld [vmem:[#allocation2 + $0x142] sm:$0xff]
        %v458 = vld [vmem:[#allocation2 + $0x152] sm:$0xff]
        %v459 = vld [vmem:[#allocation2 + $0x15a] sm:$0xff]
        %v460 = vld [vmem:[#allocation2 + $0x16a] sm:$0xff]
        %v461 = vld [vmem:[#allocation2 + $0x172] sm:$0xff]
        %v462 = vld [vmem:[%s333] sm:$0xff]
        %v463 = vld [vmem:[%s333 + $0x8] sm:$0xff]
        %v464 = vld [vmem:[%s333 + $0x18] sm:$0xff]
        %v465 = vld [vmem:[%s333 + $0x20] sm:$0xff]
        %v466 = vld [vmem:[%s333 + $0x30] sm:$0xff]
        %v467 = vld [vmem:[%s333 + $0x38] sm:$0xff]
        %v468 = vld [vmem:[%s333 + $0x48] sm:$0xff]
        %v469 = vld [vmem:[%s333 + $0x50] sm:$0xff]
        %v470 = vld [vmem:[%s333 + $0x60] sm:$0xff]
        %v471 = vld [vmem:[%s333 + $0x68] sm:$0xff]
        %v472 = vld [vmem:[%s333 + $0x78] sm:$0xff]
        %v473 = vld [vmem:[%s333 + $0x80] sm:$0xff]
        %v474 = vld [vmem:[%s333 + $0x90] sm:$0xff]
        %v475 = vld [vmem:[%s333 + $0x98] sm:$0xff]
        %v476 = vld [vmem:[%s333 + $0xa8] sm:$0xff]
        %v477 = vld [vmem:[%s333 + $0xb0] sm:$0xff]
        %v478 = vld [vmem:[%s333 + $0xc0] sm:$0xff]
        %v479 = vld [vmem:[%s333 + $0xc8] sm:$0xff]
        %v480 = vld [vmem:[%s333 + $0xd8] sm:$0xff]
        %v481 = vld [vmem:[%s333 + $0xe0] sm:$0xff]
        %v482 = vld [vmem:[%s333 + $0xf0] sm:$0xff]
        %v483 = vld [vmem:[%s333 + $0xf8] sm:$0xff]
        %v484 = vld [vmem:[%s333 + $0x108] sm:$0xff]
        %v485 = vld [vmem:[%s333 + $0x110] sm:$0xff]
        %v486 = vld [vmem:[%s333 + $0x120] sm:$0xff]
        %v487 = vld [vmem:[%s333 + $0x128] sm:$0xff]
        %v488 = vld [vmem:[%s333 + $0x138] sm:$0xff]
        %v489 = vld [vmem:[%s333 + $0x140] sm:$0xff]
        %v490 = vld [vmem:[%s333 + $0x150] sm:$0xff]
        %v491 = vld [vmem:[%s333 + $0x158] sm:$0xff]
        %v492 = vld [vmem:[%s333 + $0x168] sm:$0xff]
        %v493 = vld [vmem:[%s333 + $0x170] sm:$0xff]
        %v494 = vld [vmem:[%s333 + $0x1] sm:$0xff]
        %v495 = vld [vmem:[%s333 + $0x9] sm:$0xff]
        %v496 = vld [vmem:[%s333 + $0x19] sm:$0xff]
        %v497 = vld [vmem:[%s333 + $0x21] sm:$0xff]
        %v498 = vld [vmem:[%s333 + $0x31] sm:$0xff]
        %v499 = vld [vmem:[%s333 + $0x39] sm:$0xff]
        %v500 = vld [vmem:[%s333 + $0x49] sm:$0xff]
        %v501 = vld [vmem:[%s333 + $0x51] sm:$0xff]
        %v502 = vld [vmem:[%s333 + $0x61] sm:$0xff]
        %v503 = vld [vmem:[%s333 + $0x69] sm:$0xff]
        %v504 = vld [vmem:[%s333 + $0x79] sm:$0xff]
        %v505 = vld [vmem:[%s333 + $0x81] sm:$0xff]
        %v506 = vld [vmem:[%s333 + $0x91] sm:$0xff]
        %v507 = vld [vmem:[%s333 + $0x99] sm:$0xff]
        %v508 = vld [vmem:[%s333 + $0xa9] sm:$0xff]
        %v509 = vld [vmem:[%s333 + $0xb1] sm:$0xff]
        %v510 = vld [vmem:[%s333 + $0xc1] sm:$0xff]
        %v511 = vld [vmem:[%s333 + $0xc9] sm:$0xff]
        %v512 = vld [vmem:[%s333 + $0xd9] sm:$0xff]
        %v513 = vld [vmem:[%s333 + $0xe1] sm:$0xff]
        %v514 = vld [vmem:[%s333 + $0xf1] sm:$0xff]
        %v515 = vld [vmem:[%s333 + $0xf9] sm:$0xff]
        %v516 = vld [vmem:[%s333 + $0x109] sm:$0xff]
        %v517 = vld [vmem:[%s333 + $0x111] sm:$0xff]
        %v518 = vld [vmem:[%s333 + $0x121] sm:$0xff]
        %v519 = vld [vmem:[%s333 + $0x129] sm:$0xff]
        %v520 = vld [vmem:[%s333 + $0x139] sm:$0xff]
        %v521 = vld [vmem:[%s333 + $0x141] sm:$0xff]
        %v522 = vld [vmem:[%s333 + $0x151] sm:$0xff]
        %v523 = vld [vmem:[%s333 + $0x159] sm:$0xff]
        %v524 = vld [vmem:[%s333 + $0x169] sm:$0xff]
        %v525 = vld [vmem:[%s333 + $0x171] sm:$0xff]
        %v526 = vld [vmem:[%s333 + $0x2] sm:$0xff]
        %v527 = vld [vmem:[%s333 + $0xa] sm:$0xff]
        %v528 = vld [vmem:[%s333 + $0x1a] sm:$0xff]
        %v529 = vld [vmem:[%s333 + $0x22] sm:$0xff]
        %v530 = vld [vmem:[%s333 + $0x32] sm:$0xff]
        %v531 = vld [vmem:[%s333 + $0x3a] sm:$0xff]
        %v532 = vld [vmem:[%s333 + $0x4a] sm:$0xff]
        %v533 = vld [vmem:[%s333 + $0x52] sm:$0xff]
        %v534 = vld [vmem:[%s333 + $0x62] sm:$0xff]
        %v535 = vld [vmem:[%s333 + $0x6a] sm:$0xff]
        %v536 = vld [vmem:[%s333 + $0x7a] sm:$0xff]
        %v537 = vld [vmem:[%s333 + $0x82] sm:$0xff]
        %v538 = vld [vmem:[%s333 + $0x92] sm:$0xff]
        %v539 = vld [vmem:[%s333 + $0x9a] sm:$0xff]
        %v540 = vld [vmem:[%s333 + $0xaa] sm:$0xff]
        %v541 = vld [vmem:[%s333 + $0xb2] sm:$0xff]
        %v542 = vld [vmem:[%s333 + $0xc2] sm:$0xff]
        %v543 = vld [vmem:[%s333 + $0xca] sm:$0xff]
        %v544 = vld [vmem:[%s333 + $0xda] sm:$0xff]
        %v545 = vld [vmem:[%s333 + $0xe2] sm:$0xff]
        %v546 = vld [vmem:[%s333 + $0xf2] sm:$0xff]
        %v547 = vld [vmem:[%s333 + $0xfa] sm:$0xff]
        %v548 = vld [vmem:[%s333 + $0x10a] sm:$0xff]
        %v549 = vld [vmem:[%s333 + $0x112] sm:$0xff]
        %v550 = vld [vmem:[%s333 + $0x122] sm:$0xff]
        %v551 = vld [vmem:[%s333 + $0x12a] sm:$0xff]
        %v552 = vld [vmem:[%s333 + $0x13a] sm:$0xff]
        %v553 = vld [vmem:[%s333 + $0x142] sm:$0xff]
        %v554 = vld [vmem:[%s333 + $0x152] sm:$0xff]
        %v555 = vld [vmem:[%s333 + $0x15a] sm:$0xff]
        %v556 = vld [vmem:[%s333 + $0x16a] sm:$0xff]
        %v557 = vld [vmem:[%s333 + $0x172] sm:$0xff]
        %s558 = scalar_lea.vmem [#allocation2], 48
        %v559 = vld [vmem:[%s558] sm:$0xff]
        %v560 = vld [vmem:[%s558 + $0x8] sm:$0xff]
        %v561 = vld [vmem:[%s558 + $0x18] sm:$0xff]
        %v562 = vld [vmem:[%s558 + $0x20] sm:$0xff]
        %v563 = vld [vmem:[%s558 + $0x30] sm:$0xff]
        %v564 = vld [vmem:[%s558 + $0x38] sm:$0xff]
        %v565 = vld [vmem:[%s558 + $0x48] sm:$0xff]
        %v566 = vld [vmem:[%s558 + $0x50] sm:$0xff]
        %v567 = vld [vmem:[%s558 + $0x60] sm:$0xff]
        %v568 = vld [vmem:[%s558 + $0x68] sm:$0xff]
        %v569 = vld [vmem:[%s558 + $0x78] sm:$0xff]
        %v570 = vld [vmem:[%s558 + $0x80] sm:$0xff]
        %v571 = vld [vmem:[%s558 + $0x90] sm:$0xff]
        %v572 = vld [vmem:[%s558 + $0x98] sm:$0xff]
        %v573 = vld [vmem:[%s558 + $0xa8] sm:$0xff]
        %v574 = vld [vmem:[%s558 + $0xb0] sm:$0xff]
        %v575 = vld [vmem:[%s558 + $0xc0] sm:$0xff]
        %v576 = vld [vmem:[%s558 + $0xc8] sm:$0xff]
        %v577 = vld [vmem:[%s558 + $0xd8] sm:$0xff]
        %v578 = vld [vmem:[%s558 + $0xe0] sm:$0xff]
        %v579 = vld [vmem:[%s558 + $0xf0] sm:$0xff]
        %v580 = vld [vmem:[%s558 + $0xf8] sm:$0xff]
        %v581 = vld [vmem:[%s558 + $0x108] sm:$0xff]
        %v582 = vld [vmem:[%s558 + $0x110] sm:$0xff]
        %v583 = vld [vmem:[%s558 + $0x120] sm:$0xff]
        %v584 = vld [vmem:[%s558 + $0x128] sm:$0xff]
        %v585 = vld [vmem:[%s558 + $0x138] sm:$0xff]
        %v586 = vld [vmem:[%s558 + $0x140] sm:$0xff]
        %v587 = vld [vmem:[%s558 + $0x150] sm:$0xff]
        %v588 = vld [vmem:[%s558 + $0x158] sm:$0xff]
        %v589 = vld [vmem:[%s558 + $0x168] sm:$0xff]
        %v590 = vld [vmem:[%s558 + $0x170] sm:$0xff]
        %v591 = vld [vmem:[%s558 + $0x1] sm:$0xff]
        %v592 = vld [vmem:[%s558 + $0x9] sm:$0xff]
        %v593 = vld [vmem:[%s558 + $0x19] sm:$0xff]
        %v594 = vld [vmem:[%s558 + $0x21] sm:$0xff]
        %v595 = vld [vmem:[%s558 + $0x31] sm:$0xff]
        %v596 = vld [vmem:[%s558 + $0x39] sm:$0xff]
        %v597 = vld [vmem:[%s558 + $0x49] sm:$0xff]
        %v598 = vld [vmem:[%s558 + $0x51] sm:$0xff]
        %v599 = vld [vmem:[%s558 + $0x61] sm:$0xff]
        %v600 = vld [vmem:[%s558 + $0x69] sm:$0xff]
        %v601 = vld [vmem:[%s558 + $0x79] sm:$0xff]
        %v602 = vld [vmem:[%s558 + $0x81] sm:$0xff]
        %v603 = vld [vmem:[%s558 + $0x91] sm:$0xff]
        %v604 = vld [vmem:[%s558 + $0x99] sm:$0xff]
        %v605 = vld [vmem:[%s558 + $0xa9] sm:$0xff]
        %v606 = vld [vmem:[%s558 + $0xb1] sm:$0xff]
        %v607 = vld [vmem:[%s558 + $0xc1] sm:$0xff]
        %v608 = vld [vmem:[%s558 + $0xc9] sm:$0xff]
        %v609 = vld [vmem:[%s558 + $0xd9] sm:$0xff]
        %v610 = vld [vmem:[%s558 + $0xe1] sm:$0xff]
        %v611 = vld [vmem:[%s558 + $0xf1] sm:$0xff]
        %v612 = vld [vmem:[%s558 + $0xf9] sm:$0xff]
        %v613 = vld [vmem:[%s558 + $0x109] sm:$0xff]
        %v614 = vld [vmem:[%s558 + $0x111] sm:$0xff]
        %v615 = vld [vmem:[%s558 + $0x121] sm:$0xff]
        %v616 = vld [vmem:[%s558 + $0x129] sm:$0xff]
        %v617 = vld [vmem:[%s558 + $0x139] sm:$0xff]
        %v618 = vld [vmem:[%s558 + $0x141] sm:$0xff]
        %v619 = vld [vmem:[%s558 + $0x151] sm:$0xff]
        %v620 = vld [vmem:[%s558 + $0x159] sm:$0xff]
        %v621 = vld [vmem:[%s558 + $0x169] sm:$0xff]
        %v622 = vld [vmem:[%s558 + $0x171] sm:$0xff]
        %v623 = vld [vmem:[%s558 + $0x2] sm:$0xff]
        %v624 = vld [vmem:[%s558 + $0xa] sm:$0xff]
        %v625 = vld [vmem:[%s558 + $0x1a] sm:$0xff]
        %v626 = vld [vmem:[%s558 + $0x22] sm:$0xff]
        %v627 = vld [vmem:[%s558 + $0x32] sm:$0xff]
        %v628 = vld [vmem:[%s558 + $0x3a] sm:$0xff]
        %v629 = vld [vmem:[%s558 + $0x4a] sm:$0xff]
        %v630 = vld [vmem:[%s558 + $0x52] sm:$0xff]
        %v631 = vld [vmem:[%s558 + $0x62] sm:$0xff]
        %v632 = vld [vmem:[%s558 + $0x6a] sm:$0xff]
        %v633 = vld [vmem:[%s558 + $0x7a] sm:$0xff]
        %v634 = vld [vmem:[%s558 + $0x82] sm:$0xff]
        %v635 = vld [vmem:[%s558 + $0x92] sm:$0xff]
        %v636 = vld [vmem:[%s558 + $0x9a] sm:$0xff]
        %v637 = vld [vmem:[%s558 + $0xaa] sm:$0xff]
        %v638 = vld [vmem:[%s558 + $0xb2] sm:$0xff]
        %v639 = vld [vmem:[%s558 + $0xc2] sm:$0xff]
        %v640 = vld [vmem:[%s558 + $0xca] sm:$0xff]
        %v641 = vld [vmem:[%s558 + $0xda] sm:$0xff]
        %v642 = vld [vmem:[%s558 + $0xe2] sm:$0xff]
        %v643 = vld [vmem:[%s558 + $0xf2] sm:$0xff]
        %v644 = vld [vmem:[%s558 + $0xfa] sm:$0xff]
        %v645 = vld [vmem:[%s558 + $0x10a] sm:$0xff]
        %v646 = vld [vmem:[%s558 + $0x112] sm:$0xff]
        %v647 = vld [vmem:[%s558 + $0x122] sm:$0xff]
        %v648 = vld [vmem:[%s558 + $0x12a] sm:$0xff]
        %v649 = vld [vmem:[%s558 + $0x13a] sm:$0xff]
        %v650 = vld [vmem:[%s558 + $0x142] sm:$0xff]
        %v651 = vld [vmem:[%s558 + $0x152] sm:$0xff]
        %v652 = vld [vmem:[%s558 + $0x15a] sm:$0xff]
        %v653 = vld [vmem:[%s558 + $0x16a] sm:$0xff]
        %v654 = vld [vmem:[%s558 + $0x172] sm:$0xff]
        %687 = vrot.lane.b32.xlu0 %v398, 16
        %v688 = vpop.permute.xlu0 %687
        %689 = vrot.lane.b32.xlu0 %v399, 16
        %v690 = vpop.permute.xlu0 %689
        %691 = vrot.lane.b32.xlu0 %v400, 16
        %v692 = vpop.permute.xlu0 %691
        %693 = vrot.lane.b32.xlu0 %v401, 16
        %v694 = vpop.permute.xlu0 %693
        %695 = vrot.lane.b32.xlu0 %v402, 16
        %v696 = vpop.permute.xlu0 %695
        %697 = vrot.lane.b32.xlu0 %v403, 16
        %v698 = vpop.permute.xlu0 %697
        %699 = vrot.lane.b32.xlu0 %v404, 16
        %v700 = vpop.permute.xlu0 %699
        %701 = vrot.lane.b32.xlu0 %v405, 16
        %v702 = vpop.permute.xlu0 %701
        %703 = vrot.lane.b32.xlu0 %v406, 16
        %v704 = vpop.permute.xlu0 %703
        %705 = vrot.lane.b32.xlu0 %v407, 16
        %v706 = vpop.permute.xlu0 %705
        %707 = vrot.lane.b32.xlu0 %v408, 16
        %v708 = vpop.permute.xlu0 %707
        %709 = vrot.lane.b32.xlu0 %v409, 16
        %v710 = vpop.permute.xlu0 %709
        %711 = vrot.lane.b32.xlu0 %v410, 16
        %v712 = vpop.permute.xlu0 %711
        %713 = vrot.lane.b32.xlu0 %v411, 16
        %v714 = vpop.permute.xlu0 %713
        %715 = vrot.lane.b32.xlu0 %v412, 16
        %v716 = vpop.permute.xlu0 %715
        %717 = vrot.lane.b32.xlu0 %v413, 16
        %v718 = vpop.permute.xlu0 %717
        %719 = vrot.lane.b32.xlu0 %v414, 16
        %v720 = vpop.permute.xlu0 %719
        %721 = vrot.lane.b32.xlu0 %v415, 16
        %v722 = vpop.permute.xlu0 %721
        %723 = vrot.lane.b32.xlu0 %v416, 16
        %v724 = vpop.permute.xlu0 %723
        %725 = vrot.lane.b32.xlu0 %v417, 16
        %v726 = vpop.permute.xlu0 %725
        %727 = vrot.lane.b32.xlu0 %v418, 16
        %v728 = vpop.permute.xlu0 %727
        %729 = vrot.lane.b32.xlu0 %v419, 16
        %v730 = vpop.permute.xlu0 %729
        %731 = vrot.lane.b32.xlu0 %v420, 16
        %v732 = vpop.permute.xlu0 %731
        %733 = vrot.lane.b32.xlu0 %v421, 16
        %v734 = vpop.permute.xlu0 %733
        %735 = vrot.lane.b32.xlu0 %v422, 16
        %v736 = vpop.permute.xlu0 %735
        %737 = vrot.lane.b32.xlu0 %v423, 16
        %v738 = vpop.permute.xlu0 %737
        %739 = vrot.lane.b32.xlu0 %v424, 16
        %v740 = vpop.permute.xlu0 %739
        %741 = vrot.lane.b32.xlu0 %v425, 16
        %v742 = vpop.permute.xlu0 %741
        %743 = vrot.lane.b32.xlu0 %v426, 16
        %v744 = vpop.permute.xlu0 %743
        %745 = vrot.lane.b32.xlu0 %v427, 16
        %v746 = vpop.permute.xlu0 %745
        %747 = vrot.lane.b32.xlu0 %v428, 16
        %v748 = vpop.permute.xlu0 %747
        %749 = vrot.lane.b32.xlu0 %v429, 16
        %v750 = vpop.permute.xlu0 %749
        %815 = vrot.lane.b32.xlu0 %v430, 32
        %v816 = vpop.permute.xlu0 %815
        %817 = vrot.lane.b32.xlu0 %v431, 32
        %v818 = vpop.permute.xlu0 %817
        %819 = vrot.lane.b32.xlu0 %v432, 32
        %v820 = vpop.permute.xlu0 %819
        %821 = vrot.lane.b32.xlu0 %v433, 32
        %v822 = vpop.permute.xlu0 %821
        %823 = vrot.lane.b32.xlu0 %v434, 32
        %v824 = vpop.permute.xlu0 %823
        %825 = vrot.lane.b32.xlu0 %v435, 32
        %v826 = vpop.permute.xlu0 %825
        %827 = vrot.lane.b32.xlu0 %v436, 32
        %v828 = vpop.permute.xlu0 %827
        %829 = vrot.lane.b32.xlu0 %v437, 32
        %v830 = vpop.permute.xlu0 %829
        %831 = vrot.lane.b32.xlu0 %v438, 32
        %v832 = vpop.permute.xlu0 %831
        %833 = vrot.lane.b32.xlu0 %v439, 32
        %v834 = vpop.permute.xlu0 %833
        %835 = vrot.lane.b32.xlu0 %v440, 32
        %v836 = vpop.permute.xlu0 %835
        %837 = vrot.lane.b32.xlu0 %v441, 32
        %v838 = vpop.permute.xlu0 %837
        %839 = vrot.lane.b32.xlu0 %v442, 32
        %v840 = vpop.permute.xlu0 %839
        %841 = vrot.lane.b32.xlu0 %v443, 32
        %v842 = vpop.permute.xlu0 %841
        %843 = vrot.lane.b32.xlu0 %v444, 32
        %v844 = vpop.permute.xlu0 %843
        %845 = vrot.lane.b32.xlu0 %v445, 32
        %v846 = vpop.permute.xlu0 %845
        %847 = vrot.lane.b32.xlu0 %v446, 32
        %v848 = vpop.permute.xlu0 %847
        %849 = vrot.lane.b32.xlu0 %v447, 32
        %v850 = vpop.permute.xlu0 %849
        %851 = vrot.lane.b32.xlu0 %v448, 32
        %v852 = vpop.permute.xlu0 %851
        %853 = vrot.lane.b32.xlu0 %v449, 32
        %v854 = vpop.permute.xlu0 %853
        %855 = vrot.lane.b32.xlu0 %v450, 32
        %v856 = vpop.permute.xlu0 %855
        %857 = vrot.lane.b32.xlu0 %v451, 32
        %v858 = vpop.permute.xlu0 %857
        %859 = vrot.lane.b32.xlu0 %v452, 32
        %v860 = vpop.permute.xlu0 %859
        %861 = vrot.lane.b32.xlu0 %v453, 32
        %v862 = vpop.permute.xlu0 %861
        %863 = vrot.lane.b32.xlu0 %v454, 32
        %v864 = vpop.permute.xlu0 %863
        %865 = vrot.lane.b32.xlu0 %v455, 32
        %v866 = vpop.permute.xlu0 %865
        %867 = vrot.lane.b32.xlu0 %v456, 32
        %v868 = vpop.permute.xlu0 %867
        %869 = vrot.lane.b32.xlu0 %v457, 32
        %v870 = vpop.permute.xlu0 %869
        %871 = vrot.lane.b32.xlu0 %v458, 32
        %v872 = vpop.permute.xlu0 %871
        %873 = vrot.lane.b32.xlu0 %v459, 32
        %v874 = vpop.permute.xlu0 %873
        %875 = vrot.lane.b32.xlu0 %v460, 32
        %v876 = vpop.permute.xlu0 %875
        %877 = vrot.lane.b32.xlu0 %v461, 32
        %v878 = vpop.permute.xlu0 %877
        %943 = vrot.lane.b32.xlu0 %v462, 48
        %v944 = vpop.permute.xlu0 %943
        %945 = vrot.lane.b32.xlu0 %v463, 48
        %v946 = vpop.permute.xlu0 %945
        %947 = vrot.lane.b32.xlu0 %v464, 48
        %v948 = vpop.permute.xlu0 %947
        %949 = vrot.lane.b32.xlu0 %v465, 48
        %v950 = vpop.permute.xlu0 %949
        %951 = vrot.lane.b32.xlu0 %v466, 48
        %v952 = vpop.permute.xlu0 %951
        %953 = vrot.lane.b32.xlu0 %v467, 48
        %v954 = vpop.permute.xlu0 %953
        %955 = vrot.lane.b32.xlu0 %v468, 48
        %v956 = vpop.permute.xlu0 %955
        %957 = vrot.lane.b32.xlu0 %v469, 48
        %v958 = vpop.permute.xlu0 %957
        %959 = vrot.lane.b32.xlu0 %v470, 48
        %v960 = vpop.permute.xlu0 %959
        %961 = vrot.lane.b32.xlu0 %v471, 48
        %v962 = vpop.permute.xlu0 %961
        %963 = vrot.lane.b32.xlu0 %v472, 48
        %v964 = vpop.permute.xlu0 %963
        %965 = vrot.lane.b32.xlu0 %v473, 48
        %v966 = vpop.permute.xlu0 %965
        %967 = vrot.lane.b32.xlu0 %v474, 48
        %v968 = vpop.permute.xlu0 %967
        %969 = vrot.lane.b32.xlu0 %v475, 48
        %v970 = vpop.permute.xlu0 %969
        %971 = vrot.lane.b32.xlu0 %v476, 48
        %v972 = vpop.permute.xlu0 %971
        %973 = vrot.lane.b32.xlu0 %v477, 48
        %v974 = vpop.permute.xlu0 %973
        %975 = vrot.lane.b32.xlu0 %v478, 48
        %v976 = vpop.permute.xlu0 %975
        %977 = vrot.lane.b32.xlu0 %v479, 48
        %v978 = vpop.permute.xlu0 %977
        %979 = vrot.lane.b32.xlu0 %v480, 48
        %v980 = vpop.permute.xlu0 %979
        %981 = vrot.lane.b32.xlu0 %v481, 48
        %v982 = vpop.permute.xlu0 %981
        %983 = vrot.lane.b32.xlu0 %v482, 48
        %v984 = vpop.permute.xlu0 %983
        %985 = vrot.lane.b32.xlu0 %v483, 48
        %v986 = vpop.permute.xlu0 %985
        %987 = vrot.lane.b32.xlu0 %v484, 48
        %v988 = vpop.permute.xlu0 %987
        %989 = vrot.lane.b32.xlu0 %v485, 48
        %v990 = vpop.permute.xlu0 %989
        %991 = vrot.lane.b32.xlu0 %v486, 48
        %v992 = vpop.permute.xlu0 %991
        %993 = vrot.lane.b32.xlu0 %v487, 48
        %v994 = vpop.permute.xlu0 %993
        %995 = vrot.lane.b32.xlu0 %v488, 48
        %v996 = vpop.permute.xlu0 %995
        %997 = vrot.lane.b32.xlu0 %v489, 48
        %v998 = vpop.permute.xlu0 %997
        %999 = vrot.lane.b32.xlu0 %v490, 48
        %v1000 = vpop.permute.xlu0 %999
        %1001 = vrot.lane.b32.xlu0 %v491, 48
        %v1002 = vpop.permute.xlu0 %1001
        %1003 = vrot.lane.b32.xlu0 %v492, 48
        %v1004 = vpop.permute.xlu0 %1003
        %1005 = vrot.lane.b32.xlu0 %v493, 48
        %v1006 = vpop.permute.xlu0 %1005
        %1071 = vrot.lane.b32.xlu0 %v494, 64
        %v1072 = vpop.permute.xlu0 %1071
        %1073 = vrot.lane.b32.xlu0 %v495, 64
        %v1074 = vpop.permute.xlu0 %1073
        %1075 = vrot.lane.b32.xlu0 %v496, 64
        %v1076 = vpop.permute.xlu0 %1075
        %1077 = vrot.lane.b32.xlu0 %v497, 64
        %v1078 = vpop.permute.xlu0 %1077
        %1079 = vrot.lane.b32.xlu0 %v498, 64
        %v1080 = vpop.permute.xlu0 %1079
        %1081 = vrot.lane.b32.xlu0 %v499, 64
        %v1082 = vpop.permute.xlu0 %1081
        %1083 = vrot.lane.b32.xlu0 %v500, 64
        %v1084 = vpop.permute.xlu0 %1083
        %1085 = vrot.lane.b32.xlu0 %v501, 64
        %v1086 = vpop.permute.xlu0 %1085
        %1087 = vrot.lane.b32.xlu0 %v502, 64
        %v1088 = vpop.permute.xlu0 %1087
        %1089 = vrot.lane.b32.xlu0 %v503, 64
        %v1090 = vpop.permute.xlu0 %1089
        %1091 = vrot.lane.b32.xlu0 %v504, 64
        %v1092 = vpop.permute.xlu0 %1091
        %1093 = vrot.lane.b32.xlu0 %v505, 64
        %v1094 = vpop.permute.xlu0 %1093
        %1095 = vrot.lane.b32.xlu0 %v506, 64
        %v1096 = vpop.permute.xlu0 %1095
        %1097 = vrot.lane.b32.xlu0 %v507, 64
        %v1098 = vpop.permute.xlu0 %1097
        %1099 = vrot.lane.b32.xlu0 %v508, 64
        %v1100 = vpop.permute.xlu0 %1099
        %1101 = vrot.lane.b32.xlu0 %v509, 64
        %v1102 = vpop.permute.xlu0 %1101
        %1103 = vrot.lane.b32.xlu0 %v510, 64
        %v1104 = vpop.permute.xlu0 %1103
        %1105 = vrot.lane.b32.xlu0 %v511, 64
        %v1106 = vpop.permute.xlu0 %1105
        %1107 = vrot.lane.b32.xlu0 %v512, 64
        %v1108 = vpop.permute.xlu0 %1107
        %1109 = vrot.lane.b32.xlu0 %v513, 64
        %v1110 = vpop.permute.xlu0 %1109
        %1111 = vrot.lane.b32.xlu0 %v514, 64
        %v1112 = vpop.permute.xlu0 %1111
        %1113 = vrot.lane.b32.xlu0 %v515, 64
        %v1114 = vpop.permute.xlu0 %1113
        %1115 = vrot.lane.b32.xlu0 %v516, 64
        %v1116 = vpop.permute.xlu0 %1115
        %1117 = vrot.lane.b32.xlu0 %v517, 64
        %v1118 = vpop.permute.xlu0 %1117
        %1119 = vrot.lane.b32.xlu0 %v518, 64
        %v1120 = vpop.permute.xlu0 %1119
        %1121 = vrot.lane.b32.xlu0 %v519, 64
        %v1122 = vpop.permute.xlu0 %1121
        %1123 = vrot.lane.b32.xlu0 %v520, 64
        %v1124 = vpop.permute.xlu0 %1123
        %1125 = vrot.lane.b32.xlu0 %v521, 64
        %v1126 = vpop.permute.xlu0 %1125
        %1127 = vrot.lane.b32.xlu0 %v522, 64
        %v1128 = vpop.permute.xlu0 %1127
        %1129 = vrot.lane.b32.xlu0 %v523, 64
        %v1130 = vpop.permute.xlu0 %1129
        %1131 = vrot.lane.b32.xlu0 %v524, 64
        %v1132 = vpop.permute.xlu0 %1131
        %1133 = vrot.lane.b32.xlu0 %v525, 64
        %v1134 = vpop.permute.xlu0 %1133
        %1199 = vrot.lane.b32.xlu0 %v526, 80
        %v1200 = vpop.permute.xlu0 %1199
        %1201 = vrot.lane.b32.xlu0 %v527, 80
        %v1202 = vpop.permute.xlu0 %1201
        %1203 = vrot.lane.b32.xlu0 %v528, 80
        %v1204 = vpop.permute.xlu0 %1203
        %1205 = vrot.lane.b32.xlu0 %v529, 80
        %v1206 = vpop.permute.xlu0 %1205
        %1207 = vrot.lane.b32.xlu0 %v530, 80
        %v1208 = vpop.permute.xlu0 %1207
        %1209 = vrot.lane.b32.xlu0 %v531, 80
        %v1210 = vpop.permute.xlu0 %1209
        %1211 = vrot.lane.b32.xlu0 %v532, 80
        %v1212 = vpop.permute.xlu0 %1211
        %1213 = vrot.lane.b32.xlu0 %v533, 80
        %v1214 = vpop.permute.xlu0 %1213
        %1215 = vrot.lane.b32.xlu0 %v534, 80
        %v1216 = vpop.permute.xlu0 %1215
        %1217 = vrot.lane.b32.xlu0 %v535, 80
        %v1218 = vpop.permute.xlu0 %1217
        %1219 = vrot.lane.b32.xlu0 %v536, 80
        %v1220 = vpop.permute.xlu0 %1219
        %1221 = vrot.lane.b32.xlu0 %v537, 80
        %v1222 = vpop.permute.xlu0 %1221
        %1223 = vrot.lane.b32.xlu0 %v538, 80
        %v1224 = vpop.permute.xlu0 %1223
        %1225 = vrot.lane.b32.xlu0 %v539, 80
        %v1226 = vpop.permute.xlu0 %1225
        %1227 = vrot.lane.b32.xlu0 %v540, 80
        %v1228 = vpop.permute.xlu0 %1227
        %1229 = vrot.lane.b32.xlu0 %v541, 80
        %v1230 = vpop.permute.xlu0 %1229
        %1231 = vrot.lane.b32.xlu0 %v542, 80
        %v1232 = vpop.permute.xlu0 %1231
        %1233 = vrot.lane.b32.xlu0 %v543, 80
        %v1234 = vpop.permute.xlu0 %1233
        %1235 = vrot.lane.b32.xlu0 %v544, 80
        %v1236 = vpop.permute.xlu0 %1235
        %1237 = vrot.lane.b32.xlu0 %v545, 80
        %v1238 = vpop.permute.xlu0 %1237
        %1239 = vrot.lane.b32.xlu0 %v546, 80
        %v1240 = vpop.permute.xlu0 %1239
        %1241 = vrot.lane.b32.xlu0 %v547, 80
        %v1242 = vpop.permute.xlu0 %1241
        %1243 = vrot.lane.b32.xlu0 %v548, 80
        %v1244 = vpop.permute.xlu0 %1243
        %1245 = vrot.lane.b32.xlu0 %v549, 80
        %v1246 = vpop.permute.xlu0 %1245
        %1247 = vrot.lane.b32.xlu0 %v550, 80
        %v1248 = vpop.permute.xlu0 %1247
        %1249 = vrot.lane.b32.xlu0 %v551, 80
        %v1250 = vpop.permute.xlu0 %1249
        %1251 = vrot.lane.b32.xlu0 %v552, 80
        %v1252 = vpop.permute.xlu0 %1251
        %1253 = vrot.lane.b32.xlu0 %v553, 80
        %v1254 = vpop.permute.xlu0 %1253
        %1255 = vrot.lane.b32.xlu0 %v554, 80
        %v1256 = vpop.permute.xlu0 %1255
        %1257 = vrot.lane.b32.xlu0 %v555, 80
        %v1258 = vpop.permute.xlu0 %1257
        %1259 = vrot.lane.b32.xlu0 %v556, 80
        %v1260 = vpop.permute.xlu0 %1259
        %1261 = vrot.lane.b32.xlu0 %v557, 80
        %v1262 = vpop.permute.xlu0 %1261
        %1327 = vrot.lane.b32.xlu0 %v559, 96
        %v1328 = vpop.permute.xlu0 %1327
        %1329 = vrot.lane.b32.xlu0 %v560, 96
        %v1330 = vpop.permute.xlu0 %1329
        %1331 = vrot.lane.b32.xlu0 %v561, 96
        %v1332 = vpop.permute.xlu0 %1331
        %1333 = vrot.lane.b32.xlu0 %v562, 96
        %v1334 = vpop.permute.xlu0 %1333
        %1335 = vrot.lane.b32.xlu0 %v563, 96
        %v1336 = vpop.permute.xlu0 %1335
        %1337 = vrot.lane.b32.xlu0 %v564, 96
        %v1338 = vpop.permute.xlu0 %1337
        %1339 = vrot.lane.b32.xlu0 %v565, 96
        %v1340 = vpop.permute.xlu0 %1339
        %1341 = vrot.lane.b32.xlu0 %v566, 96
        %v1342 = vpop.permute.xlu0 %1341
        %1343 = vrot.lane.b32.xlu0 %v567, 96
        %v1344 = vpop.permute.xlu0 %1343
        %1345 = vrot.lane.b32.xlu0 %v568, 96
        %v1346 = vpop.permute.xlu0 %1345
        %1347 = vrot.lane.b32.xlu0 %v569, 96
        %v1348 = vpop.permute.xlu0 %1347
        %1349 = vrot.lane.b32.xlu0 %v570, 96
        %v1350 = vpop.permute.xlu0 %1349
        %1351 = vrot.lane.b32.xlu0 %v571, 96
        %v1352 = vpop.permute.xlu0 %1351
        %1353 = vrot.lane.b32.xlu0 %v572, 96
        %v1354 = vpop.permute.xlu0 %1353
        %1355 = vrot.lane.b32.xlu0 %v573, 96
        %v1356 = vpop.permute.xlu0 %1355
        %1357 = vrot.lane.b32.xlu0 %v574, 96
        %v1358 = vpop.permute.xlu0 %1357
        %1359 = vrot.lane.b32.xlu0 %v575, 96
        %v1360 = vpop.permute.xlu0 %1359
        %1361 = vrot.lane.b32.xlu0 %v576, 96
        %v1362 = vpop.permute.xlu0 %1361
        %1363 = vrot.lane.b32.xlu0 %v577, 96
        %v1364 = vpop.permute.xlu0 %1363
        %1365 = vrot.lane.b32.xlu0 %v578, 96
        %v1366 = vpop.permute.xlu0 %1365
        %1367 = vrot.lane.b32.xlu0 %v579, 96
        %v1368 = vpop.permute.xlu0 %1367
        %1369 = vrot.lane.b32.xlu0 %v580, 96
        %v1370 = vpop.permute.xlu0 %1369
        %1371 = vrot.lane.b32.xlu0 %v581, 96
        %v1372 = vpop.permute.xlu0 %1371
        %1373 = vrot.lane.b32.xlu0 %v582, 96
        %v1374 = vpop.permute.xlu0 %1373
        %1375 = vrot.lane.b32.xlu0 %v583, 96
        %v1376 = vpop.permute.xlu0 %1375
        %1377 = vrot.lane.b32.xlu0 %v584, 96
        %v1378 = vpop.permute.xlu0 %1377
        %1379 = vrot.lane.b32.xlu0 %v585, 96
        %v1380 = vpop.permute.xlu0 %1379
        %1381 = vrot.lane.b32.xlu0 %v586, 96
        %v1382 = vpop.permute.xlu0 %1381
        %1383 = vrot.lane.b32.xlu0 %v587, 96
        %v1384 = vpop.permute.xlu0 %1383
        %1385 = vrot.lane.b32.xlu0 %v588, 96
        %v1386 = vpop.permute.xlu0 %1385
        %1387 = vrot.lane.b32.xlu0 %v589, 96
        %v1388 = vpop.permute.xlu0 %1387
        %1389 = vrot.lane.b32.xlu0 %v590, 96
        %v1390 = vpop.permute.xlu0 %1389
        %1455 = vrot.lane.b32.xlu0 %v591, 112
        %v1456 = vpop.permute.xlu0 %1455
        %1457 = vrot.lane.b32.xlu0 %v592, 112
        %v1458 = vpop.permute.xlu0 %1457
        %1459 = vrot.lane.b32.xlu0 %v593, 112
        %v1460 = vpop.permute.xlu0 %1459
        %1461 = vrot.lane.b32.xlu0 %v594, 112
        %v1462 = vpop.permute.xlu0 %1461
        %1463 = vrot.lane.b32.xlu0 %v595, 112
        %v1464 = vpop.permute.xlu0 %1463
        %1465 = vrot.lane.b32.xlu0 %v596, 112
        %v1466 = vpop.permute.xlu0 %1465
        %1467 = vrot.lane.b32.xlu0 %v597, 112
        %v1468 = vpop.permute.xlu0 %1467
        %1469 = vrot.lane.b32.xlu0 %v598, 112
        %v1470 = vpop.permute.xlu0 %1469
        %1471 = vrot.lane.b32.xlu0 %v599, 112
        %v1472 = vpop.permute.xlu0 %1471
        %1473 = vrot.lane.b32.xlu0 %v600, 112
        %v1474 = vpop.permute.xlu0 %1473
        %1475 = vrot.lane.b32.xlu0 %v601, 112
        %v1476 = vpop.permute.xlu0 %1475
        %1477 = vrot.lane.b32.xlu0 %v602, 112
        %v1478 = vpop.permute.xlu0 %1477
        %1479 = vrot.lane.b32.xlu0 %v603, 112
        %v1480 = vpop.permute.xlu0 %1479
        %1481 = vrot.lane.b32.xlu0 %v604, 112
        %v1482 = vpop.permute.xlu0 %1481
        %1483 = vrot.lane.b32.xlu0 %v605, 112
        %v1484 = vpop.permute.xlu0 %1483
        %1485 = vrot.lane.b32.xlu0 %v606, 112
        %v1486 = vpop.permute.xlu0 %1485
        %1487 = vrot.lane.b32.xlu0 %v607, 112
        %v1488 = vpop.permute.xlu0 %1487
        %1489 = vrot.lane.b32.xlu0 %v608, 112
        %v1490 = vpop.permute.xlu0 %1489
        %1491 = vrot.lane.b32.xlu0 %v609, 112
        %v1492 = vpop.permute.xlu0 %1491
        %1493 = vrot.lane.b32.xlu0 %v610, 112
        %v1494 = vpop.permute.xlu0 %1493
        %1495 = vrot.lane.b32.xlu0 %v611, 112
        %v1496 = vpop.permute.xlu0 %1495
        %1497 = vrot.lane.b32.xlu0 %v612, 112
        %v1498 = vpop.permute.xlu0 %1497
        %1499 = vrot.lane.b32.xlu0 %v613, 112
        %v1500 = vpop.permute.xlu0 %1499
        %1501 = vrot.lane.b32.xlu0 %v614, 112
        %v1502 = vpop.permute.xlu0 %1501
        %1503 = vrot.lane.b32.xlu0 %v615, 112
        %v1504 = vpop.permute.xlu0 %1503
        %1505 = vrot.lane.b32.xlu0 %v616, 112
        %v1506 = vpop.permute.xlu0 %1505
        %1507 = vrot.lane.b32.xlu0 %v617, 112
        %v1508 = vpop.permute.xlu0 %1507
        %1509 = vrot.lane.b32.xlu0 %v618, 112
        %v1510 = vpop.permute.xlu0 %1509
        %1511 = vrot.lane.b32.xlu0 %v619, 112
        %v1512 = vpop.permute.xlu0 %1511
        %1513 = vrot.lane.b32.xlu0 %v620, 112
        %v1514 = vpop.permute.xlu0 %1513
        %1515 = vrot.lane.b32.xlu0 %v621, 112
        %v1516 = vpop.permute.xlu0 %1515
        %1517 = vrot.lane.b32.xlu0 %v622, 112
        %v1518 = vpop.permute.xlu0 %1517
        %v1551 = vsel %vm245, %v366, %v688
        %v1552 = vsel %vm245, %v367, %v690
        %v1553 = vsel %vm245, %v368, %v692
        %v1554 = vsel %vm245, %v369, %v694
        %v1555 = vsel %vm245, %v370, %v696
        %v1556 = vsel %vm245, %v371, %v698
        %v1557 = vsel %vm245, %v372, %v700
        %v1558 = vsel %vm245, %v373, %v702
        %v1559 = vsel %vm245, %v374, %v704
        %v1560 = vsel %vm245, %v375, %v706
        %v1561 = vsel %vm245, %v376, %v708
        %v1562 = vsel %vm245, %v377, %v710
        %v1563 = vsel %vm245, %v378, %v712
        %v1564 = vsel %vm245, %v379, %v714
        %v1565 = vsel %vm245, %v380, %v716
        %v1566 = vsel %vm245, %v381, %v718
        %v1567 = vsel %vm245, %v382, %v720
        %v1568 = vsel %vm245, %v383, %v722
        %v1569 = vsel %vm245, %v384, %v724
        %v1570 = vsel %vm245, %v385, %v726
        %v1571 = vsel %vm245, %v386, %v728
        %v1572 = vsel %vm245, %v387, %v730
        %v1573 = vsel %vm245, %v388, %v732
        %v1574 = vsel %vm245, %v389, %v734
        %v1575 = vsel %vm245, %v390, %v736
        %v1576 = vsel %vm245, %v391, %v738
        %v1577 = vsel %vm245, %v392, %v740
        %v1578 = vsel %vm245, %v393, %v742
        %v1579 = vsel %vm245, %v394, %v744
        %v1580 = vsel %vm245, %v395, %v746
        %v1581 = vsel %vm245, %v396, %v748
        %v1582 = vsel %vm245, %v397, %v750
        %vm1583 = vcmask 261120
        %v1584 = vsel %vm1583, %v1551, %v816
        %v1585 = vsel %vm1583, %v1552, %v818
        %v1586 = vsel %vm1583, %v1553, %v820
        %v1587 = vsel %vm1583, %v1554, %v822
        %v1588 = vsel %vm1583, %v1555, %v824
        %v1589 = vsel %vm1583, %v1556, %v826
        %v1590 = vsel %vm1583, %v1557, %v828
        %v1591 = vsel %vm1583, %v1558, %v830
        %v1592 = vsel %vm1583, %v1559, %v832
        %v1593 = vsel %vm1583, %v1560, %v834
        %v1594 = vsel %vm1583, %v1561, %v836
        %v1595 = vsel %vm1583, %v1562, %v838
        %v1596 = vsel %vm1583, %v1563, %v840
        %v1597 = vsel %vm1583, %v1564, %v842
        %v1598 = vsel %vm1583, %v1565, %v844
        %v1599 = vsel %vm1583, %v1566, %v846
        %v1600 = vsel %vm1583, %v1567, %v848
        %v1601 = vsel %vm1583, %v1568, %v850
        %v1602 = vsel %vm1583, %v1569, %v852
        %v1603 = vsel %vm1583, %v1570, %v854
        %v1604 = vsel %vm1583, %v1571, %v856
        %v1605 = vsel %vm1583, %v1572, %v858
        %v1606 = vsel %vm1583, %v1573, %v860
        %v1607 = vsel %vm1583, %v1574, %v862
        %v1608 = vsel %vm1583, %v1575, %v864
        %v1609 = vsel %vm1583, %v1576, %v866
        %v1610 = vsel %vm1583, %v1577, %v868
        %v1611 = vsel %vm1583, %v1578, %v870
        %v1612 = vsel %vm1583, %v1579, %v872
        %v1613 = vsel %vm1583, %v1580, %v874
        %v1614 = vsel %vm1583, %v1581, %v876
        %v1615 = vsel %vm1583, %v1582, %v878
        %vm1616 = vcmask 392192
        %v1617 = vsel %vm1616, %v1584, %v944
        %v1618 = vsel %vm1616, %v1585, %v946
        %v1619 = vsel %vm1616, %v1586, %v948
        %v1620 = vsel %vm1616, %v1587, %v950
        %v1621 = vsel %vm1616, %v1588, %v952
        %v1622 = vsel %vm1616, %v1589, %v954
        %v1623 = vsel %vm1616, %v1590, %v956
        %v1624 = vsel %vm1616, %v1591, %v958
        %v1625 = vsel %vm1616, %v1592, %v960
        %v1626 = vsel %vm1616, %v1593, %v962
        %v1627 = vsel %vm1616, %v1594, %v964
        %v1628 = vsel %vm1616, %v1595, %v966
        %v1629 = vsel %vm1616, %v1596, %v968
        %v1630 = vsel %vm1616, %v1597, %v970
        %v1631 = vsel %vm1616, %v1598, %v972
        %v1632 = vsel %vm1616, %v1599, %v974
        %v1633 = vsel %vm1616, %v1600, %v976
        %v1634 = vsel %vm1616, %v1601, %v978
        %v1635 = vsel %vm1616, %v1602, %v980
        %v1636 = vsel %vm1616, %v1603, %v982
        %v1637 = vsel %vm1616, %v1604, %v984
        %v1638 = vsel %vm1616, %v1605, %v986
        %v1639 = vsel %vm1616, %v1606, %v988
        %v1640 = vsel %vm1616, %v1607, %v990
        %v1641 = vsel %vm1616, %v1608, %v992
        %v1642 = vsel %vm1616, %v1609, %v994
        %v1643 = vsel %vm1616, %v1610, %v996
        %v1644 = vsel %vm1616, %v1611, %v998
        %v1645 = vsel %vm1616, %v1612, %v1000
        %v1646 = vsel %vm1616, %v1613, %v1002
        %v1647 = vsel %vm1616, %v1614, %v1004
        %v1648 = vsel %vm1616, %v1615, %v1006
        %vm1649 = vcmask 523264
        %v1650 = vsel %vm1649, %v1617, %v1072
        %v1651 = vsel %vm1649, %v1618, %v1074
        %v1652 = vsel %vm1649, %v1619, %v1076
        %v1653 = vsel %vm1649, %v1620, %v1078
        %v1654 = vsel %vm1649, %v1621, %v1080
        %v1655 = vsel %vm1649, %v1622, %v1082
        %v1656 = vsel %vm1649, %v1623, %v1084
        %v1657 = vsel %vm1649, %v1624, %v1086
        %v1658 = vsel %vm1649, %v1625, %v1088
        %v1659 = vsel %vm1649, %v1626, %v1090
        %v1660 = vsel %vm1649, %v1627, %v1092
        %v1661 = vsel %vm1649, %v1628, %v1094
        %v1662 = vsel %vm1649, %v1629, %v1096
        %v1663 = vsel %vm1649, %v1630, %v1098
        %v1664 = vsel %vm1649, %v1631, %v1100
        %v1665 = vsel %vm1649, %v1632, %v1102
        %v1666 = vsel %vm1649, %v1633, %v1104
        %v1667 = vsel %vm1649, %v1634, %v1106
        %v1668 = vsel %vm1649, %v1635, %v1108
        %v1669 = vsel %vm1649, %v1636, %v1110
        %v1670 = vsel %vm1649, %v1637, %v1112
        %v1671 = vsel %vm1649, %v1638, %v1114
        %v1672 = vsel %vm1649, %v1639, %v1116
        %v1673 = vsel %vm1649, %v1640, %v1118
        %v1674 = vsel %vm1649, %v1641, %v1120
        %v1675 = vsel %vm1649, %v1642, %v1122
        %v1676 = vsel %vm1649, %v1643, %v1124
        %v1677 = vsel %vm1649, %v1644, %v1126
        %v1678 = vsel %vm1649, %v1645, %v1128
        %v1679 = vsel %vm1649, %v1646, %v1130
        %v1680 = vsel %vm1649, %v1647, %v1132
        %v1681 = vsel %vm1649, %v1648, %v1134
        %vm1682 = vcmask 654336
        %v1683 = vsel %vm1682, %v1650, %v1200
        %v1684 = vsel %vm1682, %v1651, %v1202
        %v1685 = vsel %vm1682, %v1652, %v1204
        %v1686 = vsel %vm1682, %v1653, %v1206
        %v1687 = vsel %vm1682, %v1654, %v1208
        %v1688 = vsel %vm1682, %v1655, %v1210
        %v1689 = vsel %vm1682, %v1656, %v1212
        %v1690 = vsel %vm1682, %v1657, %v1214
        %v1691 = vsel %vm1682, %v1658, %v1216
        %v1692 = vsel %vm1682, %v1659, %v1218
        %v1693 = vsel %vm1682, %v1660, %v1220
        %v1694 = vsel %vm1682, %v1661, %v1222
        %v1695 = vsel %vm1682, %v1662, %v1224
        %v1696 = vsel %vm1682, %v1663, %v1226
        %v1697 = vsel %vm1682, %v1664, %v1228
        %v1698 = vsel %vm1682, %v1665, %v1230
        %v1699 = vsel %vm1682, %v1666, %v1232
        %v1700 = vsel %vm1682, %v1667, %v1234
        %v1701 = vsel %vm1682, %v1668, %v1236
        %v1702 = vsel %vm1682, %v1669, %v1238
        %v1703 = vsel %vm1682, %v1670, %v1240
        %v1704 = vsel %vm1682, %v1671, %v1242
        %v1705 = vsel %vm1682, %v1672, %v1244
        %v1706 = vsel %vm1682, %v1673, %v1246
        %v1707 = vsel %vm1682, %v1674, %v1248
        %v1708 = vsel %vm1682, %v1675, %v1250
        %v1709 = vsel %vm1682, %v1676, %v1252
        %v1710 = vsel %vm1682, %v1677, %v1254
        %v1711 = vsel %vm1682, %v1678, %v1256
        %v1712 = vsel %vm1682, %v1679, %v1258
        %v1713 = vsel %vm1682, %v1680, %v1260
        %v1714 = vsel %vm1682, %v1681, %v1262
        %vm1715 = vcmask 785408
        %v1716 = vsel %vm1715, %v1683, %v1328
        %v1717 = vsel %vm1715, %v1684, %v1330
        %v1718 = vsel %vm1715, %v1685, %v1332
        %v1719 = vsel %vm1715, %v1686, %v1334
        %v1720 = vsel %vm1715, %v1687, %v1336
        %v1721 = vsel %vm1715, %v1688, %v1338
        %v1722 = vsel %vm1715, %v1689, %v1340
        %v1723 = vsel %vm1715, %v1690, %v1342
        %v1724 = vsel %vm1715, %v1691, %v1344
        %v1725 = vsel %vm1715, %v1692, %v1346
        %v1726 = vsel %vm1715, %v1693, %v1348
        %v1727 = vsel %vm1715, %v1694, %v1350
        %v1728 = vsel %vm1715, %v1695, %v1352
        %v1729 = vsel %vm1715, %v1696, %v1354
        %v1730 = vsel %vm1715, %v1697, %v1356
        %v1731 = vsel %vm1715, %v1698, %v1358
        %v1732 = vsel %vm1715, %v1699, %v1360
        %v1733 = vsel %vm1715, %v1700, %v1362
        %v1734 = vsel %vm1715, %v1701, %v1364
        %v1735 = vsel %vm1715, %v1702, %v1366
        %v1736 = vsel %vm1715, %v1703, %v1368
        %v1737 = vsel %vm1715, %v1704, %v1370
        %v1738 = vsel %vm1715, %v1705, %v1372
        %v1739 = vsel %vm1715, %v1706, %v1374
        %v1740 = vsel %vm1715, %v1707, %v1376
        %v1741 = vsel %vm1715, %v1708, %v1378
        %v1742 = vsel %vm1715, %v1709, %v1380
        %v1743 = vsel %vm1715, %v1710, %v1382
        %v1744 = vsel %vm1715, %v1711, %v1384
        %v1745 = vsel %vm1715, %v1712, %v1386
        %v1746 = vsel %vm1715, %v1713, %v1388
        %v1747 = vsel %vm1715, %v1714, %v1390
        %vm1748 = vcmask 916480
        %v1749 = vsel %vm1748, %v1716, %v1456
        %v1750 = vsel %vm1748, %v1717, %v1458
        %v1751 = vsel %vm1748, %v1718, %v1460
        %v1752 = vsel %vm1748, %v1719, %v1462
        %v1753 = vsel %vm1748, %v1720, %v1464
        %v1754 = vsel %vm1748, %v1721, %v1466
        %v1755 = vsel %vm1748, %v1722, %v1468
        %v1756 = vsel %vm1748, %v1723, %v1470
        %v1757 = vsel %vm1748, %v1724, %v1472
        %v1758 = vsel %vm1748, %v1725, %v1474
        %v1759 = vsel %vm1748, %v1726, %v1476
        %v1760 = vsel %vm1748, %v1727, %v1478
        %v1761 = vsel %vm1748, %v1728, %v1480
        %v1762 = vsel %vm1748, %v1729, %v1482
        %v1763 = vsel %vm1748, %v1730, %v1484
        %v1764 = vsel %vm1748, %v1731, %v1486
        %v1765 = vsel %vm1748, %v1732, %v1488
        %v1766 = vsel %vm1748, %v1733, %v1490
        %v1767 = vsel %vm1748, %v1734, %v1492
        %v1768 = vsel %vm1748, %v1735, %v1494
        %v1769 = vsel %vm1748, %v1736, %v1496
        %v1770 = vsel %vm1748, %v1737, %v1498
        %v1771 = vsel %vm1748, %v1738, %v1500
        %v1772 = vsel %vm1748, %v1739, %v1502
        %v1773 = vsel %vm1748, %v1740, %v1504
        %v1774 = vsel %vm1748, %v1741, %v1506
        %v1775 = vsel %vm1748, %v1742, %v1508
        %v1776 = vsel %vm1748, %v1743, %v1510
        %v1777 = vsel %vm1748, %v1744, %v1512
        %v1778 = vsel %vm1748, %v1745, %v1514
        %v1779 = vsel %vm1748, %v1746, %v1516
        %v1780 = vsel %vm1748, %v1747, %v1518
        %v1781 = vld [vmem:[%s1] sm:$0xff]
        %v1782 = vld [vmem:[%s1 + $0x8] sm:$0xff]
        %v1783 = vld [vmem:[%s1 + $0x10] sm:$0xff]
        %v1784 = vld [vmem:[%s1 + $0x18] sm:$0xff]
        %v1785 = vld [vmem:[%s1 + $0x20] sm:$0xff]
        %v1786 = vld [vmem:[%s1 + $0x28] sm:$0xff]
        %v1787 = vld [vmem:[%s1 + $0x30] sm:$0xff]
        %v1788 = vld [vmem:[%s1 + $0x38] sm:$0xff]
        %v1789 = vld [vmem:[%s1 + $0x40] sm:$0xff]
        %v1790 = vld [vmem:[%s1 + $0x48] sm:$0xff]
        %v1791 = vld [vmem:[%s1 + $0x50] sm:$0xff]
        %v1792 = vld [vmem:[%s1 + $0x58] sm:$0xff]
        %v1793 = vld [vmem:[%s1 + $0x60] sm:$0xff]
        %v1794 = vld [vmem:[%s1 + $0x68] sm:$0xff]
        %v1795 = vld [vmem:[%s1 + $0x70] sm:$0xff]
        %v1796 = vld [vmem:[%s1 + $0x78] sm:$0xff]
        %v1797 = vld [vmem:[%s1 + $0x80] sm:$0xff]
        %v1798 = vld [vmem:[%s1 + $0x88] sm:$0xff]
        %v1799 = vld [vmem:[%s2] sm:$0x1]
        %v1801 = vlaneseq
        %v1802 = vshrl.u32 %v1801, 7
        %v1803 = vsub.s32 0, %v1802
        %v1804 = vrot.slane %v1799, %v1803
        %v1807 = vsel %vm245, %v623, 0
        %v1810 = vsel %vm245, %v624, 0
        %v1813 = vsel %vm245, %v625, 0
        %v1816 = vsel %vm245, %v626, 0
        %v1819 = vsel %vm245, %v627, 0
        %v1822 = vsel %vm245, %v628, 0
        %v1825 = vsel %vm245, %v629, 0
        %v1828 = vsel %vm245, %v630, 0
        %v1831 = vsel %vm245, %v631, 0
        %v1834 = vsel %vm245, %v632, 0
        %v1837 = vsel %vm245, %v633, 0
        %v1840 = vsel %vm245, %v634, 0
        %v1843 = vsel %vm245, %v635, 0
        %v1846 = vsel %vm245, %v636, 0
        %v1849 = vsel %vm245, %v637, 0
        %v1852 = vsel %vm245, %v638, 0
        %v1855 = vsel %vm245, %v639, 0
        %v1858 = vsel %vm245, %v640, 0
        %v1861 = vsel %vm245, %v641, 0
        %v1864 = vsel %vm245, %v642, 0
        %v1867 = vsel %vm245, %v643, 0
        %v1870 = vsel %vm245, %v644, 0
        %v1873 = vsel %vm245, %v645, 0
        %v1876 = vsel %vm245, %v646, 0
        %v1879 = vsel %vm245, %v647, 0
        %v1882 = vsel %vm245, %v648, 0
        %v1885 = vsel %vm245, %v649, 0
        %v1888 = vsel %vm245, %v650, 0
        %v1891 = vsel %vm245, %v651, 0
        %v1894 = vsel %vm245, %v652, 0
        %v1897 = vsel %vm245, %v653, 0
        %v1900 = vsel %vm245, %v654, 0
        %1902 = vmatprep.subr.mxu0 0.0
        %1903 = vmatpush1.msra.mxu0 %v1796
        %1904 = vmatprep.subr.mxu0 0.0
        %1905 = vmatpush1.msra.mxu0 %v1795
        %1906 = vmatprep.subr.mxu0 0.0
        %1907 = vmatpush1.msra.mxu0 %v1794
        %1908 = vmatprep.subr.mxu0 0.0
        %1909 = vmatpush1.msra.mxu0 %v1793
        %1910 = vmatprep.subr.mxu0 0.0
        %1911 = vmatpush1.msra.mxu0 %v1792
        %1912 = vmatprep.subr.mxu0 0.0
        %1913 = vmatpush1.msra.mxu0 %v1791
        %1914 = vmatprep.subr.mxu0 0.0
        %1915 = vmatpush1.msra.mxu0 %v1790
        %1916 = vmatprep.subr.mxu0 0.0
        %1917 = vmatpush1.msra.mxu0 %v1789
        %1918 = vmatprep.subr.mxu0 0.0
        %1919 = vmatpush1.msra.mxu0 %v1788
        %1920 = vmatprep.subr.mxu0 0.0
        %1921 = vmatpush1.msra.mxu0 %v1787
        %1922 = vmatprep.subr.mxu0 0.0
        %1923 = vmatpush1.msra.mxu0 %v1786
        %1924 = vmatprep.subr.mxu0 0.0
        %1925 = vmatpush1.msra.mxu0 %v1785
        %1926 = vmatprep.subr.mxu0 0.0
        %1927 = vmatpush1.msra.mxu0 %v1784
        %1928 = vmatprep.subr.mxu0 0.0
        %1929 = vmatpush1.msra.mxu0 %v1783
        %1930 = vmatprep.subr.mxu0 0.0
        %1931 = vmatpush1.msra.mxu0 %v1782
        %1932 = vmatprep.subr.mxu0 0.0
        %1933 = vmatpush1.msra.mxu0 %v1781
        %1934 = vmatprep.subr.mxu0 0.0
        %1935 = vmatpush2.msra.mxu0 0.0
        %1936 = vmatprep.subr.mxu0 0.0
        %1937 = vmatpush2.msra.mxu0 0.0
        %1938 = vmatprep.subr.mxu0 0.0
        %1939 = vmatpush2.msra.mxu0 0.0
        %1940 = vmatprep.subr.mxu0 0.0
        %1941 = vmatpush2.msra.mxu0 0.0
        %1942 = vmatprep.subr.mxu0 0.0
        %1943 = vmatpush2.msra.mxu0 0.0
        %1944 = vmatprep.subr.mxu0 0.0
        %1945 = vmatpush2.msra.mxu0 0.0
        %1946 = vmatprep.subr.mxu0 0.0
        %1947 = vmatpush2.msra.mxu0 0.0
        %1948 = vmatprep.subr.mxu0 0.0
        %1949 = vmatpush2.msra.mxu0 0.0
        %1950 = vmatprep.subr.mxu0 0.0
        %1951 = vmatpush2.msra.mxu0 0.0
        %1952 = vmatprep.subr.mxu0 0.0
        %1953 = vmatpush2.msra.mxu0 0.0
        %1954 = vmatprep.subr.mxu0 0.0
        %1955 = vmatpush2.msra.mxu0 0.0
        %1956 = vmatprep.subr.mxu0 0.0
        %1957 = vmatpush2.msra.mxu0 0.0
        %1958 = vmatprep.subr.mxu0 0.0
        %1959 = vmatpush2.msra.mxu0 0.0
        %1960 = vmatprep.subr.mxu0 0.0
        %1961 = vmatpush2.msra.mxu0 0.0
        %1962 = vmatprep.subr.mxu0 0.0
        %1963 = vmatpush2.msra.mxu0 %v1798
        %1964 = vmatprep.subr.mxu0 0.0
        %1965 = vmatpush2.msra.mxu0 %v1797
        %1966 = vmatprep.mubr.f32.mxu0 %v1807
        %1967 = vmatmul.mubr.f32.gmra.mxu0 %v1749
        %v1968 = vpop.f32.mrf.mxu0
        %v1969 = vadd.f32 %v1804, %v1968
        %v1970 = vpop.f32.mrf.mxu0
        %1971 = vmatprep.mubr.f32.mxu0 %v1810
        %1972 = vmatmul.mubr.f32.gmra.mxu0 %v1750
        %v1973 = vpop.f32.mrf.mxu0
        %v1974 = vadd.f32 %v1804, %v1973
        %v1975 = vpop.f32.mrf.mxu0
        %1976 = vmatprep.mubr.f32.mxu0 %v1813
        %1977 = vmatmul.mubr.f32.gmra.mxu0 %v1751
        %v1978 = vpop.f32.mrf.mxu0
        %v1979 = vadd.f32 %v1804, %v1978
        %v1980 = vpop.f32.mrf.mxu0
        %1981 = vmatprep.mubr.f32.mxu0 %v1816
        %1982 = vmatmul.mubr.f32.gmra.mxu0 %v1752
        %v1983 = vpop.f32.mrf.mxu0
        %v1984 = vadd.f32 %v1804, %v1983
        %v1985 = vpop.f32.mrf.mxu0
        %1986 = vmatprep.mubr.f32.mxu0 %v1819
        %1987 = vmatmul.mubr.f32.gmra.mxu0 %v1753
        %v1988 = vpop.f32.mrf.mxu0
        %v1989 = vadd.f32 %v1804, %v1988
        %v1990 = vpop.f32.mrf.mxu0
        %1991 = vmatprep.mubr.f32.mxu0 %v1822
        %1992 = vmatmul.mubr.f32.gmra.mxu0 %v1754
        %v1993 = vpop.f32.mrf.mxu0
        %v1994 = vadd.f32 %v1804, %v1993
        %v1995 = vpop.f32.mrf.mxu0
        %1996 = vmatprep.mubr.f32.mxu0 %v1825
        %1997 = vmatmul.mubr.f32.gmra.mxu0 %v1755
        %v1998 = vpop.f32.mrf.mxu0
        %v1999 = vadd.f32 %v1804, %v1998
        %v2000 = vpop.f32.mrf.mxu0
        %2001 = vmatprep.mubr.f32.mxu0 %v1828
        %2002 = vmatmul.mubr.f32.gmra.mxu0 %v1756
        %v2003 = vpop.f32.mrf.mxu0
        %v2004 = vadd.f32 %v1804, %v2003
        %v2005 = vpop.f32.mrf.mxu0
        %2006 = vmatprep.mubr.f32.mxu0 %v1831
        %2007 = vmatmul.mubr.f32.gmra.mxu0 %v1757
        %v2008 = vpop.f32.mrf.mxu0
        %v2009 = vadd.f32 %v1804, %v2008
        %v2010 = vpop.f32.mrf.mxu0
        %2011 = vmatprep.mubr.f32.mxu0 %v1834
        %2012 = vmatmul.mubr.f32.gmra.mxu0 %v1758
        %v2013 = vpop.f32.mrf.mxu0
        %v2014 = vadd.f32 %v1804, %v2013
        %v2015 = vpop.f32.mrf.mxu0
        %2016 = vmatprep.mubr.f32.mxu0 %v1837
        %2017 = vmatmul.mubr.f32.gmra.mxu0 %v1759
        %v2018 = vpop.f32.mrf.mxu0
        %v2019 = vadd.f32 %v1804, %v2018
        %v2020 = vpop.f32.mrf.mxu0
        %2021 = vmatprep.mubr.f32.mxu0 %v1840
        %2022 = vmatmul.mubr.f32.gmra.mxu0 %v1760
        %v2023 = vpop.f32.mrf.mxu0
        %v2024 = vadd.f32 %v1804, %v2023
        %v2025 = vpop.f32.mrf.mxu0
        %2026 = vmatprep.mubr.f32.mxu0 %v1843
        %2027 = vmatmul.mubr.f32.gmra.mxu0 %v1761
        %v2028 = vpop.f32.mrf.mxu0
        %v2029 = vadd.f32 %v1804, %v2028
        %v2030 = vpop.f32.mrf.mxu0
        %2031 = vmatprep.mubr.f32.mxu0 %v1846
        %2032 = vmatmul.mubr.f32.gmra.mxu0 %v1762
        %v2033 = vpop.f32.mrf.mxu0
        %v2034 = vadd.f32 %v1804, %v2033
        %v2035 = vpop.f32.mrf.mxu0
        %2036 = vmatprep.mubr.f32.mxu0 %v1849
        %2037 = vmatmul.mubr.f32.gmra.mxu0 %v1763
        %v2038 = vpop.f32.mrf.mxu0
        %v2039 = vadd.f32 %v1804, %v2038
        %v2040 = vpop.f32.mrf.mxu0
        %2041 = vmatprep.mubr.f32.mxu0 %v1852
        %2042 = vmatmul.mubr.f32.gmra.mxu0 %v1764
        %v2043 = vpop.f32.mrf.mxu0
        %v2044 = vadd.f32 %v1804, %v2043
        %v2045 = vpop.f32.mrf.mxu0
        %2046 = vmatprep.mubr.f32.mxu0 %v1855
        %2047 = vmatmul.mubr.f32.gmra.mxu0 %v1765
        %v2048 = vpop.f32.mrf.mxu0
        %v2049 = vadd.f32 %v1804, %v2048
        %v2050 = vpop.f32.mrf.mxu0
        %2051 = vmatprep.mubr.f32.mxu0 %v1858
        %2052 = vmatmul.mubr.f32.gmra.mxu0 %v1766
        %v2053 = vpop.f32.mrf.mxu0
        %v2054 = vadd.f32 %v1804, %v2053
        %v2055 = vpop.f32.mrf.mxu0
        %2056 = vmatprep.mubr.f32.mxu0 %v1861
        %2057 = vmatmul.mubr.f32.gmra.mxu0 %v1767
        %v2058 = vpop.f32.mrf.mxu0
        %v2059 = vadd.f32 %v1804, %v2058
        %v2060 = vpop.f32.mrf.mxu0
        %2061 = vmatprep.mubr.f32.mxu0 %v1864
        %2062 = vmatmul.mubr.f32.gmra.mxu0 %v1768
        %v2063 = vpop.f32.mrf.mxu0
        %v2064 = vadd.f32 %v1804, %v2063
        %v2065 = vpop.f32.mrf.mxu0
        %2066 = vmatprep.mubr.f32.mxu0 %v1867
        %2067 = vmatmul.mubr.f32.gmra.mxu0 %v1769
        %v2068 = vpop.f32.mrf.mxu0
        %v2069 = vadd.f32 %v1804, %v2068
        %v2070 = vpop.f32.mrf.mxu0
        %2071 = vmatprep.mubr.f32.mxu0 %v1870
        %2072 = vmatmul.mubr.f32.gmra.mxu0 %v1770
        %v2073 = vpop.f32.mrf.mxu0
        %v2074 = vadd.f32 %v1804, %v2073
        %v2075 = vpop.f32.mrf.mxu0
        %2076 = vmatprep.mubr.f32.mxu0 %v1873
        %2077 = vmatmul.mubr.f32.gmra.mxu0 %v1771
        %v2078 = vpop.f32.mrf.mxu0
        %v2079 = vadd.f32 %v1804, %v2078
        %v2080 = vpop.f32.mrf.mxu0
        %2081 = vmatprep.mubr.f32.mxu0 %v1876
        %2082 = vmatmul.mubr.f32.gmra.mxu0 %v1772
        %v2083 = vpop.f32.mrf.mxu0
        %v2084 = vadd.f32 %v1804, %v2083
        %v2085 = vpop.f32.mrf.mxu0
        %2086 = vmatprep.mubr.f32.mxu0 %v1879
        %2087 = vmatmul.mubr.f32.gmra.mxu0 %v1773
        %v2088 = vpop.f32.mrf.mxu0
        %v2089 = vadd.f32 %v1804, %v2088
        %v2090 = vpop.f32.mrf.mxu0
        %2091 = vmatprep.mubr.f32.mxu0 %v1882
        %2092 = vmatmul.mubr.f32.gmra.mxu0 %v1774
        %v2093 = vpop.f32.mrf.mxu0
        %v2094 = vadd.f32 %v1804, %v2093
        %v2095 = vpop.f32.mrf.mxu0
        %2096 = vmatprep.mubr.f32.mxu0 %v1885
        %2097 = vmatmul.mubr.f32.gmra.mxu0 %v1775
        %v2098 = vpop.f32.mrf.mxu0
        %v2099 = vadd.f32 %v1804, %v2098
        %v2100 = vpop.f32.mrf.mxu0
        %2101 = vmatprep.mubr.f32.mxu0 %v1888
        %2102 = vmatmul.mubr.f32.gmra.mxu0 %v1776
        %v2103 = vpop.f32.mrf.mxu0
        %v2104 = vadd.f32 %v1804, %v2103
        %v2105 = vpop.f32.mrf.mxu0
        %2106 = vmatprep.mubr.f32.mxu0 %v1891
        %2107 = vmatmul.mubr.f32.gmra.mxu0 %v1777
        %v2108 = vpop.f32.mrf.mxu0
        %v2109 = vadd.f32 %v1804, %v2108
        %v2110 = vpop.f32.mrf.mxu0
        %2111 = vmatprep.mubr.f32.mxu0 %v1894
        %2112 = vmatmul.mubr.f32.gmra.mxu0 %v1778
        %v2113 = vpop.f32.mrf.mxu0
        %v2114 = vadd.f32 %v1804, %v2113
        %v2115 = vpop.f32.mrf.mxu0
        %2116 = vmatprep.mubr.f32.mxu0 %v1897
        %2117 = vmatmul.mubr.f32.gmra.mxu0 %v1779
        %v2118 = vpop.f32.mrf.mxu0
        %v2119 = vadd.f32 %v1804, %v2118
        %v2120 = vpop.f32.mrf.mxu0
        %2121 = vmatprep.mubr.f32.mxu0 %v1900
        %2122 = vmatmul.mubr.f32.gmra.mxu0 %v1780
        %v2123 = vpop.f32.mrf.mxu0
        %v2124 = vadd.f32 %v1804, %v2123
        %v2125 = vpop.f32.mrf.mxu0
        %2126 = vdwg.mxu0
        %v2127 = vmax.f32 %v1969, 0.0
        %v2128 = vmax.f32 %v1974, 0.0
        %v2129 = vmax.f32 %v1979, 0.0
        %v2130 = vmax.f32 %v1984, 0.0
        %v2131 = vmax.f32 %v1989, 0.0
        %v2132 = vmax.f32 %v1994, 0.0
        %v2133 = vmax.f32 %v1999, 0.0
        %v2134 = vmax.f32 %v2004, 0.0
        %v2135 = vmax.f32 %v2009, 0.0
        %v2136 = vmax.f32 %v2014, 0.0
        %v2137 = vmax.f32 %v2019, 0.0
        %v2138 = vmax.f32 %v2024, 0.0
        %v2139 = vmax.f32 %v2029, 0.0
        %v2140 = vmax.f32 %v2034, 0.0
        %v2141 = vmax.f32 %v2039, 0.0
        %v2142 = vmax.f32 %v2044, 0.0
        %v2143 = vmax.f32 %v2049, 0.0
        %v2144 = vmax.f32 %v2054, 0.0
        %v2145 = vmax.f32 %v2059, 0.0
        %v2146 = vmax.f32 %v2064, 0.0
        %v2147 = vmax.f32 %v2069, 0.0
        %v2148 = vmax.f32 %v2074, 0.0
        %v2149 = vmax.f32 %v2079, 0.0
        %v2150 = vmax.f32 %v2084, 0.0
        %v2151 = vmax.f32 %v2089, 0.0
        %v2152 = vmax.f32 %v2094, 0.0
        %v2153 = vmax.f32 %v2099, 0.0
        %v2154 = vmax.f32 %v2104, 0.0
        %v2155 = vmax.f32 %v2109, 0.0
        %v2156 = vmax.f32 %v2114, 0.0
        %v2157 = vmax.f32 %v2119, 0.0
        %v2158 = vmax.f32 %v2124, 0.0
        %v2159 = vld [vmem:[%s3] sm:$0x1f]
        %v2160 = vld [vmem:[%s4] sm:$0x1f]
        %2162 = vset.pattern.permute.xlu0 0
        %2163 = vperm.xlu0 %2162, %v2160
        %v2164 = vpop.permute.xlu0 %2163
        %vm2166 = vcmask 97280
        %v2168 = vsel %vm2166, %v2159, 0
        %v2171 = vsel %vm2166, %v2127, 0
        %v2174 = vsel %vm2166, %v2128, 0
        %v2177 = vsel %vm2166, %v2129, 0
        %v2180 = vsel %vm2166, %v2130, 0
        %v2183 = vsel %vm2166, %v2131, 0
        %v2186 = vsel %vm2166, %v2132, 0
        %v2189 = vsel %vm2166, %v2133, 0
        %v2192 = vsel %vm2166, %v2134, 0
        %v2195 = vsel %vm2166, %v2135, 0
        %v2198 = vsel %vm2166, %v2136, 0
        %v2201 = vsel %vm2166, %v2137, 0
        %v2204 = vsel %vm2166, %v2138, 0
        %v2207 = vsel %vm2166, %v2139, 0
        %v2210 = vsel %vm2166, %v2140, 0
        %v2213 = vsel %vm2166, %v2141, 0
        %v2216 = vsel %vm2166, %v2142, 0
        %v2219 = vsel %vm2166, %v2143, 0
        %v2222 = vsel %vm2166, %v2144, 0
        %v2225 = vsel %vm2166, %v2145, 0
        %v2228 = vsel %vm2166, %v2146, 0
        %v2231 = vsel %vm2166, %v2147, 0
        %v2234 = vsel %vm2166, %v2148, 0
        %v2237 = vsel %vm2166, %v2149, 0
        %v2240 = vsel %vm2166, %v2150, 0
        %v2243 = vsel %vm2166, %v2151, 0
        %v2246 = vsel %vm2166, %v2152, 0
        %v2249 = vsel %vm2166, %v2153, 0
        %v2252 = vsel %vm2166, %v2154, 0
        %v2255 = vsel %vm2166, %v2155, 0
        %v2258 = vsel %vm2166, %v2156, 0
        %v2261 = vsel %vm2166, %v2157, 0
        %v2264 = vsel %vm2166, %v2158, 0
        %2266 = vmatprep.subr.mxu0 0.0
        %2267 = vmatpush1.xpose.msra.mxu0 %v2216
        %2268 = vmatprep.subr.mxu0 0.0
        %2269 = vmatpush1.xpose.msra.mxu0 %v2213
        %2270 = vmatprep.subr.mxu0 0.0
        %2271 = vmatpush1.xpose.msra.mxu0 %v2210
        %2272 = vmatprep.subr.mxu0 0.0
        %2273 = vmatpush1.xpose.msra.mxu0 %v2207
        %2274 = vmatprep.subr.mxu0 0.0
        %2275 = vmatpush1.xpose.msra.mxu0 %v2204
        %2276 = vmatprep.subr.mxu0 0.0
        %2277 = vmatpush1.xpose.msra.mxu0 %v2201
        %2278 = vmatprep.subr.mxu0 0.0
        %2279 = vmatpush1.xpose.msra.mxu0 %v2198
        %2280 = vmatprep.subr.mxu0 0.0
        %2281 = vmatpush1.xpose.msra.mxu0 %v2195
        %2282 = vmatprep.subr.mxu0 0.0
        %2283 = vmatpush1.xpose.msra.mxu0 %v2192
        %2284 = vmatprep.subr.mxu0 0.0
        %2285 = vmatpush1.xpose.msra.mxu0 %v2189
        %2286 = vmatprep.subr.mxu0 0.0
        %2287 = vmatpush1.xpose.msra.mxu0 %v2186
        %2288 = vmatprep.subr.mxu0 0.0
        %2289 = vmatpush1.xpose.msra.mxu0 %v2183
        %2290 = vmatprep.subr.mxu0 0.0
        %2291 = vmatpush1.xpose.msra.mxu0 %v2180
        %2292 = vmatprep.subr.mxu0 0.0
        %2293 = vmatpush1.xpose.msra.mxu0 %v2177
        %2294 = vmatprep.subr.mxu0 0.0
        %2295 = vmatpush1.xpose.msra.mxu0 %v2174
        %2296 = vmatprep.subr.mxu0 0.0
        %2297 = vmatpush1.xpose.msra.mxu0 %v2171
        %2298 = vmatprep.subr.mxu0 0.0
        %2299 = vmatpush2.xpose.msra.mxu0 %v2264
        %2300 = vmatprep.subr.mxu0 0.0
        %2301 = vmatpush2.xpose.msra.mxu0 %v2261
        %2302 = vmatprep.subr.mxu0 0.0
        %2303 = vmatpush2.xpose.msra.mxu0 %v2258
        %2304 = vmatprep.subr.mxu0 0.0
        %2305 = vmatpush2.xpose.msra.mxu0 %v2255
        %2306 = vmatprep.subr.mxu0 0.0
        %2307 = vmatpush2.xpose.msra.mxu0 %v2252
        %2308 = vmatprep.subr.mxu0 0.0
        %2309 = vmatpush2.xpose.msra.mxu0 %v2249
        %2310 = vmatprep.subr.mxu0 0.0
        %2311 = vmatpush2.xpose.msra.mxu0 %v2246
        %2312 = vmatprep.subr.mxu0 0.0
        %2313 = vmatpush2.xpose.msra.mxu0 %v2243
        %2314 = vmatprep.subr.mxu0 0.0
        %2315 = vmatpush2.xpose.msra.mxu0 %v2240
        %2316 = vmatprep.subr.mxu0 0.0
        %2317 = vmatpush2.xpose.msra.mxu0 %v2237
        %2318 = vmatprep.subr.mxu0 0.0
        %2319 = vmatpush2.xpose.msra.mxu0 %v2234
        %2320 = vmatprep.subr.mxu0 0.0
        %2321 = vmatpush2.xpose.msra.mxu0 %v2231
        %2322 = vmatprep.subr.mxu0 0.0
        %2323 = vmatpush2.xpose.msra.mxu0 %v2228
        %2324 = vmatprep.subr.mxu0 0.0
        %2325 = vmatpush2.xpose.msra.mxu0 %v2225
        %2326 = vmatprep.subr.mxu0 0.0
        %2327 = vmatpush2.xpose.msra.mxu0 %v2222
        %2328 = vmatprep.subr.mxu0 0.0
        %2329 = vmatpush2.xpose.msra.mxu0 %v2219
        %2330 = vmatprep.mubr.f32.mxu0 0.0
        %2331 = vmatmul.mubr.f32.gmra.mxu0 %v2168
        %v2332 = vpop.f32.mrf.mxu0
        %v2333 = vadd.f32 %v2164, %v2332
        %v2334 = vpop.f32.mrf.mxu0
        %v2335 = vadd.f32 %v2164, %v2334
        %2336 = vdwg.mxu0
        %2337 = vst [vmem:[%s244] sm:$0x1f] %v2333
        %2338 = vst [vmem:[%s244 + $0x8] sm:$0x1f] %v2335
        %p2339 = scmp.lt.s32.totalorder %s19, 1
        %s2340 = scalar_select %p2339, %s19, 1
        %s2341 = smul.addr %s2340, 2
        %s2342 = smul.addr %s2341, 8
        %s2343 = scalar_lea.vmem %s5, %s2342
        // Predicated region
        $region45: #{tpu_custom_call.1} parent=39 // pred_check
          %p2344 = pneg %p147
        $region46: #{tpu_custom_call.1} parent=39 // pred_check_branch
          %2346 = sbr.rel (%p2344) target = $region48
        $region47: #{tpu_custom_call.1} parent=39 // pred_region
          _
        $region48: #{tpu_custom_call.1} parent=39 // pred_fallthru
          _
      $region40: #{tpu_custom_call.1} parent=5 // pred_fallthru
        _
      %p2347 = scmp.le.s32.totalorder 2, %s14
      // Predicated region
      $region49: #{tpu_custom_call.1} parent=5 // pred_check
        %p2348 = pneg %p2347
      $region50: #{tpu_custom_call.1} parent=5 // pred_check_branch
        %2350 = sbr.rel (%p2348) target = $region52
      $region51: #{tpu_custom_call.1} parent=5 // pred_region
        %s2351 = ssub.s32 %s14, 2
        // Predicated region
        $region53: #{tpu_custom_call.1} parent=51 // pred_check
          %p2352 = pneg %p153
        $region54: #{tpu_custom_call.1} parent=51 // pred_check_branch
          %2354 = sbr.rel (%p2352) target = $region56
        $region55: #{tpu_custom_call.1} parent=51 // pred_region
          %p2355 = scmp.lt.s32.totalorder %s20, 1
          %s2356 = scalar_select %p2355, %s20, 1
          %s2357 = smul.addr %s2356, 2
          %s2358 = smul.addr %s2357, 8
          %s2359 = scalar_lea.vmem %s5, %s2358
        $region56: #{tpu_custom_call.1} parent=51 // pred_fallthru
          _
      $region52: #{tpu_custom_call.1} parent=5 // pred_fallthru
        _
    $region6: #{tpu_custom_call.1} parent=1 // loop_footer
      %s18 = sadd.s32 1, %s14
    $region7: #{tpu_custom_call.1} parent=1 // loop_footer_branch
      %13 = sbr.rel target = $region3
    $region8: #{tpu_custom_call.1} parent=1 // loop_exit
      _
    %2360 = vsyncpa [#allocation4], 1
    %s2361 = scalar_lea.sflag [#allocation4], 1
    %2362 = vsyncpa %s2361, 1

</llo_original>
